<compile_context>
chip_gen: v5e
topology: v5e:2x2
jax: 0.10.0
libtpu: 0.0.40
codegen_flags: <defaults>
</compile_context>

<pallas_src>
import math
import jax
import jax.numpy as jnp
from jax import lax
from jax.experimental import pallas as pl
from jax.experimental.pallas import tpu as pltpu


def qfunc_kernel(obs_ref, act_ref,
                 t_ref, w1o_ref, b1_ref,
                 w2_ref, b2_ref,
                 w3_ref, b3_ref,
                 out_ref):
    tb = obs_ref.shape[0]
    num_actions = t_ref.shape[0]

    # One-hot on the MXU: (TB, A) bf16 from a single iota+compare, then a tiny
    # matmul against the folded table T = We @ W1e.  Out-of-range / padded
    # action ids produce an all-zero row (bias still applied below).
    act = act_ref[...]                                      # (TB, 1) int32
    col = lax.broadcasted_iota(jnp.int32, (tb, num_actions), 1)
    onehot = (col == act).astype(jnp.bfloat16)              # (TB, A)

    # Layer 1: obs @ W1o + onehot @ T + b1, ReLU  (bf16 operands, f32 acc)
    h = jnp.dot(obs_ref[...], w1o_ref[...], preferred_element_type=jnp.float32)
    h = h + jnp.dot(onehot, t_ref[...], preferred_element_type=jnp.float32)
    h = jnp.maximum(h + b1_ref[...], 0.0)

    # Layer 2: Linear(inner, inner) + ReLU (dominant MXU pass)
    h = jnp.dot(h.astype(jnp.bfloat16), w2_ref[...],
                preferred_element_type=jnp.float32) + b2_ref[...]
    h = jnp.maximum(h, 0.0)

    # Head: Linear(inner, 1) on VPU + lane reduce (skip the N=1 MXU matmul).
    q = jnp.sum(h * w3_ref[...], axis=-1)                   # (TB,)
    out_ref[...] = q[None, :] + b3_ref[...]                 # (1, TB) lane-dense


def _fold_params(params):
    """Fold embed_action into layer-1's action rows (exact algebraic rewrite)."""
    t = params["we"] @ params["w1e"]                         # (A, inner) f32
    b1f = params["b1"] + params["be"] @ params["w1e"]        # (1, inner) f32
    return {
        "t": t.astype(jnp.bfloat16),                         # MXU operand
        "w1o": params["w1o"].astype(jnp.bfloat16),           # (obs_dim, inner)
        "b1": b1f.astype(jnp.float32),
        "w2": params["w2"].astype(jnp.bfloat16),             # (inner, inner)
        "b2": params["b2"].astype(jnp.float32),
        "w3row": params["w3"].T.astype(jnp.float32),         # (1, inner)
        "b3": params["b3"].astype(jnp.float32),              # (1, 1)
    }


def _pick_tile_b(B, tile_b=None):
    """Batch tile: multiple of 256, <=1024, and >=2 grid steps when B allows."""
    if tile_b is not None:
        return max(256, 256 * ((int(tile_b) + 255) // 256))
    MAX_TILE = 1024
    if B <= 256:
        return 256
    half = 256 * ((-(-B // 2) + 255) // 256)   # ceil(B/2) rounded up to 256
    return max(256, min(MAX_TILE, half))


def fully_connected_q_forward(obs, actions, params, tile_b=None):
    """obs: (B, obs_dim) f32, actions: (B, 1) int32 -> (B,) f32."""
    B, obs_dim = obs.shape
    tb = _pick_tile_b(B, tile_b)
    num_tiles = pl.cdiv(B, tb)
    b_pad = num_tiles * tb

    if b_pad != B:                                           # pad ragged tail tile
        obs = jnp.pad(obs, ((0, b_pad - B), (0, 0)))
        actions = jnp.pad(actions, ((0, b_pad - B), (0, 0)))

    fp = _fold_params(params)
    obs_bf = obs.astype(jnp.bfloat16)                        # cast once, not per tile

    action_dim, inner_dim = fp["t"].shape

    const2 = lambda i: (0, 0)                                # weights: VMEM-resident
    in_specs = [
        pl.BlockSpec((tb, obs_dim), lambda i: (i, 0)),       # obs tile (bf16)
        pl.BlockSpec((tb, 1), lambda i: (i, 0)),             # action ids tile
        pl.BlockSpec((action_dim, inner_dim), const2),       # folded action table, bf16
        pl.BlockSpec((obs_dim, inner_dim), const2),          # W1 (obs rows), bf16
        pl.BlockSpec((1, inner_dim), const2),                # b1 (folded)
        pl.BlockSpec((inner_dim, inner_dim), const2),        # W2, bf16
        pl.BlockSpec((1, inner_dim), const2),                # b2
        pl.BlockSpec((1, inner_dim), const2),                # w3 row
        pl.BlockSpec((1, 1), const2),                        # b3
    ]

    out = pl.pallas_call(
        qfunc_kernel,
        out_shape=jax.ShapeDtypeStruct((1, b_pad), jnp.float32),
        grid=(num_tiles,),
        in_specs=in_specs,
        out_specs=pl.BlockSpec((1, tb), lambda i: (0, i)),
        compiler_params=pltpu.CompilerParams(
            dimension_semantics=("parallel",),
            vmem_limit_bytes=32 * 1024 * 1024),
    )(obs_bf, actions,
      fp["t"], fp["w1o"], fp["b1"],
      fp["w2"], fp["b2"],
      fp["w3row"], fp["b3"])

    return out.reshape(b_pad)[:B]                            # .squeeze(-1), drop pad


def init_params(key, obs_dim, action_dim, action_embd_dim, inner_dim):
    """Synthetic init mirroring the module (orthogonal_init=False path).

    network linears: xavier_normal weights, zero biases.
    embed_action: PyTorch default Linear init.
    Weights stored transposed: (in_features, out_features).
    """
    ks = jax.random.split(key, 4)

    def xavier_normal(k, fan_in, fan_out):
        std = math.sqrt(2.0 / (fan_in + fan_out))
        return std * jax.random.normal(k, (fan_in, fan_out), dtype=jnp.float32)

    input_dim = obs_dim + action_embd_dim

    bound = 1.0 / math.sqrt(action_dim)
    we = jax.random.uniform(ks[0], (action_dim, action_embd_dim),
                            minval=-bound, maxval=bound, dtype=jnp.float32)
    be = jnp.zeros((1, action_embd_dim), jnp.float32)

    w1 = xavier_normal(ks[1], input_dim, inner_dim)
    return {
        "we": we,
        "be": be,
        "w1o": w1[:obs_dim, :],           # rows of W1 multiplying obs
        "w1e": w1[obs_dim:, :],           # rows of W1 multiplying action emb
        "b1": jnp.zeros((1, inner_dim), jnp.float32),
        "w2": xavier_normal(ks[2], inner_dim, inner_dim),
        "b2": jnp.zeros((1, inner_dim), jnp.float32),
        "w3": xavier_normal(ks[3], inner_dim, 1),
        "b3": jnp.zeros((1, 1), jnp.float32),
    }


def _reference(obs, actions, params):
    """Pure-JAX f32 reference of the original module math."""
    action_dim = params["we"].shape[0]
    onehot = jax.nn.one_hot(actions[:, 0], action_dim, dtype=jnp.float32)
    a_emb = onehot @ params["we"] + params["be"]
    x = jnp.concatenate([obs, a_emb], axis=-1)
    w1 = jnp.concatenate([params["w1o"], params["w1e"]], axis=0)
    h = jnp.maximum(x @ w1 + params["b1"], 0.0)
    h = jnp.maximum(h @ params["w2"] + params["b2"], 0.0)
    return (h @ params["w3"] + params["b3"])[:, 0]


if __name__ == "__main__":
    OBS_DIM = 16          # observation_dim
    ACTION_DIM = 6        # number of discrete actions
    ACTION_EMBD_DIM = 64  # action_embd_dim
    INNER_DIM = 256       # inner_dim

    key = jax.random.PRNGKey(0)
    k_obs, k_act, k_par, k_obs2, k_act2 = jax.random.split(key, 5)
    params = init_params(k_par, OBS_DIM, ACTION_DIM, ACTION_EMBD_DIM, INNER_DIM)

    # Small batch (single tile, heavily padded -- correctness check).
    B = 8
    obs = jax.random.normal(k_obs, (B, OBS_DIM), dtype=jnp.float32)
    actions = jax.random.randint(k_act, (B, 1), 0, ACTION_DIM, dtype=jnp.int32)

    q = jax.block_until_ready(fully_connected_q_forward(obs, actions, params))
    assert q.shape == (B,), q.shape
    assert q.dtype == jnp.float32
    q_ref = _reference(obs, actions, params)
    # bf16 matmul operands with f32 accumulation -> relaxed tolerance.
    assert jnp.allclose(q, q_ref, atol=2e-2, rtol=2e-2), (q, q_ref)

    # Multi-tile, ragged batch (exercises the grid loop + tail padding).
    B2 = 520
    obs2 = jax.random.normal(k_obs2, (B2, OBS_DIM), dtype=jnp.float32)
    actions2 = jax.random.randint(k_act2, (B2, 1), 0, ACTION_DIM, dtype=jnp.int32)
    q2 = jax.block_until_ready(fully_connected_q_forward(obs2, actions2, params))
    assert q2.shape == (B2,), q2.shape
    q2_ref = _reference(obs2, actions2, params)
    assert jnp.allclose(q2, q2_ref, atol=2e-2, rtol=2e-2)

    print("KERNEL_OK")
</pallas_src>

<mosaic_0001>
module attributes {stable_mosaic.version = 11 : i64} {
  func.func @qfunc_kernel(%arg0: i32, %arg1: memref<256x16xbf16, #tpu.memory_space<vmem>>, %arg2: memref<256x1xi32, #tpu.memory_space<vmem>>, %arg3: memref<6x256xbf16, #tpu.memory_space<vmem>>, %arg4: memref<16x256xbf16, #tpu.memory_space<vmem>>, %arg5: memref<1x256xf32, #tpu.memory_space<vmem>>, %arg6: memref<256x256xbf16, #tpu.memory_space<vmem>>, %arg7: memref<1x256xf32, #tpu.memory_space<vmem>>, %arg8: memref<1x256xf32, #tpu.memory_space<vmem>>, %arg9: memref<1x1xf32, #tpu.memory_space<vmem>>, %arg10: memref<1x256xf32, #tpu.memory_space<vmem>>) attributes {dimension_semantics = [#tpu.dimension_semantics<parallel>], iteration_bounds = array<i64: 1>, scalar_prefetch = 0 : i64, scratch_operands = 0 : i64, tpu.core_type = #tpu.core_type<tc>, window_params = [{transform_indices = @transform_0, window_bounds = array<i64: 256, 16>}, {transform_indices = @transform_1, window_bounds = array<i64: 256, 1>}, {pipeline_mode = #tpu.pipeline_mode<synchronous>, transform_indices = @transform_2, window_bounds = array<i64: 6, 256>}, {pipeline_mode = #tpu.pipeline_mode<synchronous>, transform_indices = @transform_3, window_bounds = array<i64: 16, 256>}, {pipeline_mode = #tpu.pipeline_mode<synchronous>, transform_indices = @transform_4, window_bounds = array<i64: 1, 256>}, {pipeline_mode = #tpu.pipeline_mode<synchronous>, transform_indices = @transform_5, window_bounds = array<i64: 256, 256>}, {pipeline_mode = #tpu.pipeline_mode<synchronous>, transform_indices = @transform_6, window_bounds = array<i64: 1, 256>}, {pipeline_mode = #tpu.pipeline_mode<synchronous>, transform_indices = @transform_7, window_bounds = array<i64: 1, 256>}, {pipeline_mode = #tpu.pipeline_mode<synchronous>, transform_indices = @transform_8, window_bounds = array<i64: 1, 1>}, {transform_indices = @transform_9, window_bounds = array<i64: 1, 256>}]} {
    %c0 = arith.constant 0 : index
    %c0_0 = arith.constant 0 : index
    %0 = vector.load %arg2[%c0, %c0_0] : memref<256x1xi32, #tpu.memory_space<vmem>>, vector<256x1xi32>
    %1 = tpu.iota {dimensions = array<i32: 1>} : vector<256x6xi32>
    %2 = vector.broadcast %0 : vector<256x1xi32> to vector<256x6xi32>
    %3 = arith.cmpi eq, %1, %2 : vector<256x6xi32>
    %4 = arith.extui %3 : vector<256x6xi1> to vector<256x6xi32>
    %5 = arith.sitofp %4 : vector<256x6xi32> to vector<256x6xf32>
    %6 = arith.truncf %5 : vector<256x6xf32> to vector<256x6xbf16>
    %c0_1 = arith.constant 0 : index
    %c0_2 = arith.constant 0 : index
    %7 = vector.load %arg1[%c0_1, %c0_2] : memref<256x16xbf16, #tpu.memory_space<vmem>>, vector<256x16xbf16>
    %c0_3 = arith.constant 0 : index
    %c0_4 = arith.constant 0 : index
    %8 = vector.load %arg4[%c0_3, %c0_4] : memref<16x256xbf16, #tpu.memory_space<vmem>>, vector<16x256xbf16>
    %cst = arith.constant dense<0.000000e+00> : vector<256x256xf32>
    %9 = tpu.matmul %7, %8, %cst {dimension_numbers = #tpu.dot_dimension_numbers<[1], [0], [0], [1], [0, 0, 1, 1], [], []>} : vector<256x16xbf16>, vector<16x256xbf16>, vector<256x256xf32> -> vector<256x256xf32>
    %c0_5 = arith.constant 0 : index
    %c0_6 = arith.constant 0 : index
    %10 = vector.load %arg3[%c0_5, %c0_6] : memref<6x256xbf16, #tpu.memory_space<vmem>>, vector<6x256xbf16>
    %cst_7 = arith.constant dense<0.000000e+00> : vector<256x256xf32>
    %11 = tpu.matmul %6, %10, %cst_7 {dimension_numbers = #tpu.dot_dimension_numbers<[1], [0], [0], [1], [0, 0, 1, 1], [], []>} : vector<256x6xbf16>, vector<6x256xbf16>, vector<256x256xf32> -> vector<256x256xf32>
    %12 = arith.addf %9, %11 : vector<256x256xf32>
    %c0_8 = arith.constant 0 : index
    %c0_9 = arith.constant 0 : index
    %13 = vector.load %arg5[%c0_8, %c0_9] : memref<1x256xf32, #tpu.memory_space<vmem>>, vector<1x256xf32>
    %14 = vector.broadcast %13 : vector<1x256xf32> to vector<256x256xf32>
    %15 = arith.addf %12, %14 : vector<256x256xf32>
    %cst_10 = arith.constant 0.000000e+00 : f32
    %16 = vector.broadcast %cst_10 : f32 to vector<256x256xf32>
    %17 = arith.maximumf %15, %16 : vector<256x256xf32>
    %18 = arith.truncf %17 : vector<256x256xf32> to vector<256x256xbf16>
    %c0_11 = arith.constant 0 : index
    %c0_12 = arith.constant 0 : index
    %19 = vector.load %arg6[%c0_11, %c0_12] : memref<256x256xbf16, #tpu.memory_space<vmem>>, vector<256x256xbf16>
    %cst_13 = arith.constant dense<0.000000e+00> : vector<256x256xf32>
    %20 = tpu.matmul %18, %19, %cst_13 {dimension_numbers = #tpu.dot_dimension_numbers<[1], [0], [0], [1], [0, 0, 1, 1], [], []>} : vector<256x256xbf16>, vector<256x256xbf16>, vector<256x256xf32> -> vector<256x256xf32>
    %c0_14 = arith.constant 0 : index
    %c0_15 = arith.constant 0 : index
    %21 = vector.load %arg7[%c0_14, %c0_15] : memref<1x256xf32, #tpu.memory_space<vmem>>, vector<1x256xf32>
    %22 = vector.broadcast %21 : vector<1x256xf32> to vector<256x256xf32>
    %23 = arith.addf %20, %22 : vector<256x256xf32>
    %cst_16 = arith.constant 0.000000e+00 : f32
    %24 = vector.broadcast %cst_16 : f32 to vector<256x256xf32>
    %25 = arith.maximumf %23, %24 : vector<256x256xf32>
    %c0_17 = arith.constant 0 : index
    %c0_18 = arith.constant 0 : index
    %26 = vector.load %arg8[%c0_17, %c0_18] : memref<1x256xf32, #tpu.memory_space<vmem>>, vector<1x256xf32>
    %27 = vector.broadcast %26 : vector<1x256xf32> to vector<256x256xf32>
    %28 = arith.mulf %25, %27 : vector<256x256xf32>
    %cst_19 = arith.constant dense<0.000000e+00> : vector<256xf32>
    %29 = vector.multi_reduction <add>, %28, %cst_19 [1] : vector<256x256xf32> to vector<256xf32>
    %30 = vector.shape_cast %29 : vector<256xf32> to vector<1x256xf32>
    %c0_20 = arith.constant 0 : index
    %c0_21 = arith.constant 0 : index
    %31 = vector.load %arg9[%c0_20, %c0_21] : memref<1x1xf32, #tpu.memory_space<vmem>>, vector<1x1xf32>
    %32 = vector.broadcast %31 : vector<1x1xf32> to vector<1x256xf32>
    %33 = arith.addf %30, %32 : vector<1x256xf32>
    %c0_22 = arith.constant 0 : index
    %c0_23 = arith.constant 0 : index
    %34 = vector.load %arg10[%c0_22, %c0_23] : memref<1x256xf32, #tpu.memory_space<vmem>>, vector<1x256xf32>
    tpu.vector_store %arg10[%c0_22, %c0_23], %33 {strides = array<i32>} : memref<1x256xf32, #tpu.memory_space<vmem>>, vector<1x256xf32>,
    return
  }
  func.func @transform_0(%arg0: i32) -> (i32, i32) {
    %c0_i32 = arith.constant 0 : i32
    %c0_i32_0 = arith.constant 0 : i32
    return %arg0, %c0_i32 : i32, i32
  }
  func.func @transform_1(%arg0: i32) -> (i32, i32) {
    %c0_i32 = arith.constant 0 : i32
    %c0_i32_0 = arith.constant 0 : i32
    return %arg0, %c0_i32 : i32, i32
  }
  func.func @transform_2(%arg0: i32) -> (i32, i32) {
    %c0_i32 = arith.constant 0 : i32
    %c0_i32_0 = arith.constant 0 : i32
    %c0_i32_1 = arith.constant 0 : i32
    return %c0_i32, %c0_i32_0 : i32, i32
  }
  func.func @transform_3(%arg0: i32) -> (i32, i32) {
    %c0_i32 = arith.constant 0 : i32
    %c0_i32_0 = arith.constant 0 : i32
    %c0_i32_1 = arith.constant 0 : i32
    return %c0_i32, %c0_i32_0 : i32, i32
  }
  func.func @transform_4(%arg0: i32) -> (i32, i32) {
    %c0_i32 = arith.constant 0 : i32
    %c0_i32_0 = arith.constant 0 : i32
    %c0_i32_1 = arith.constant 0 : i32
    return %c0_i32, %c0_i32_0 : i32, i32
  }
  func.func @transform_5(%arg0: i32) -> (i32, i32) {
    %c0_i32 = arith.constant 0 : i32
    %c0_i32_0 = arith.constant 0 : i32
    %c0_i32_1 = arith.constant 0 : i32
    return %c0_i32, %c0_i32_0 : i32, i32
  }
  func.func @transform_6(%arg0: i32) -> (i32, i32) {
    %c0_i32 = arith.constant 0 : i32
    %c0_i32_0 = arith.constant 0 : i32
    %c0_i32_1 = arith.constant 0 : i32
    return %c0_i32, %c0_i32_0 : i32, i32
  }
  func.func @transform_7(%arg0: i32) -> (i32, i32) {
    %c0_i32 = arith.constant 0 : i32
    %c0_i32_0 = arith.constant 0 : i32
    %c0_i32_1 = arith.constant 0 : i32
    return %c0_i32, %c0_i32_0 : i32, i32
  }
  func.func @transform_8(%arg0: i32) -> (i32, i32) {
    %c0_i32 = arith.constant 0 : i32
    %c0_i32_0 = arith.constant 0 : i32
    %c0_i32_1 = arith.constant 0 : i32
    return %c0_i32, %c0_i32_0 : i32, i32
  }
  func.func @transform_9(%arg0: i32) -> (i32, i32) {
    %c0_i32 = arith.constant 0 : i32
    %c0_i32_0 = arith.constant 0 : i32
    return %c0_i32, %arg0 : i32, i32
  }
}

</mosaic_0001>

<llo_original>
// kernel: tpu_custom_call.1
$region0: #{tpu_custom_call.1}
  #allocation0 [shape = 'u32[]', space=smem, size = 0x4, offset = 0x4, fixed_abs, tag = 'smem constant byte address 0x4 - core index']
  #allocation1 [shape = 'u32[72,128]{1,0:T(1,128)}', space=vmem, size = 0x9000, scoped, tag = 'internal scratch']
  #allocation2 [shape = 'f32[1,1]{1,0:T(1,128)S(1)}', space=vmem, size = 0x200, scoped, tag = 'scoped memory for tpu_custom_call.1']
  %s0 = inlined_call_operand.vmem [shape: bf16[256,16], index: 0, kind: input, shape index: {}]
  %s1 = inlined_call_operand.vmem [shape: s32[256,1], index: 1, kind: input, shape index: {}]
  %s2 = inlined_call_operand.vmem [shape: bf16[6,256], index: 2, kind: input, shape index: {}]
  %s3 = inlined_call_operand.vmem [shape: bf16[16,256], index: 3, kind: input, shape index: {}]
  %s4 = inlined_call_operand.vmem [shape: f32[1,256], index: 4, kind: input, shape index: {}]
  %s5 = inlined_call_operand.vmem [shape: bf16[256,256], index: 5, kind: input, shape index: {}]
  %s6 = inlined_call_operand.vmem [shape: f32[1,256], index: 6, kind: input, shape index: {}]
  %s7 = inlined_call_operand.vmem [shape: f32[1,256], index: 7, kind: input, shape index: {}]
  %s8 = inlined_call_operand.<no memory space> [shape: f32[1,1], index: 8, kind: input, shape index: {}]
  %s9 = inlined_call_operand.hbm [shape: f32[1,256], index: 9, kind: output, shape index: {}]
  %s10 = sld [smem:[#allocation0]]
  $region46: #{tpu_custom_call.1} parent=0
    _
  %s12 = ssub.s32 1, %s10
  %s13 = scalar_select 0, %s12, %s10
  %v14 = vstv %s8
  %15 = vst [vmem:[#allocation2] sm:$0x1] %v14
  $region1: #{tpu_custom_call.1} parent=0
    #allocation3 [shape = 'u8[1024]{0}', space=vmem, size = 0x400, scoped, tag = 'output window, operand 0, single buffered']
    #allocation4 [shape = 's32[1]{0}', space=sflag, size = 0x4, scoped, tag = 'scoped memory for tpu_custom_call.1']
    %16 = vsyncpa [#allocation4], 0
    // Predicated region
    $region2: #{tpu_custom_call.1} parent=1 // pred_check
      _
    $region3: #{tpu_custom_call.1} parent=1 // pred_check_branch
      %18 = sbr.rel (0) target = $region5
    $region4: #{tpu_custom_call.1} parent=1 // pred_region
      _
    $region5: #{tpu_custom_call.1} parent=1 // pred_fallthru
      _
    // Predicated region
    $region6: #{tpu_custom_call.1} parent=1 // pred_check
      _
    $region7: #{tpu_custom_call.1} parent=1 // pred_check_branch
      %20 = sbr.rel (0) target = $region9
    $region8: #{tpu_custom_call.1} parent=1 // pred_region
      _
    $region9: #{tpu_custom_call.1} parent=1 // pred_fallthru
      _
    // Predicated region
    $region10: #{tpu_custom_call.1} parent=1 // pred_check
      _
    $region11: #{tpu_custom_call.1} parent=1 // pred_check_branch
      %22 = sbr.rel (0) target = $region13
    $region12: #{tpu_custom_call.1} parent=1 // pred_region
      _
    $region13: #{tpu_custom_call.1} parent=1 // pred_fallthru
      _
    // Predicated region
    $region14: #{tpu_custom_call.1} parent=1 // pred_check
      _
    $region15: #{tpu_custom_call.1} parent=1 // pred_check_branch
      %24 = sbr.rel (0) target = $region17
    $region16: #{tpu_custom_call.1} parent=1 // pred_region
      _
    $region17: #{tpu_custom_call.1} parent=1 // pred_fallthru
      _
    // Predicated region
    $region18: #{tpu_custom_call.1} parent=1 // pred_check
      _
    $region19: #{tpu_custom_call.1} parent=1 // pred_check_branch
      %26 = sbr.rel (0) target = $region21
    $region20: #{tpu_custom_call.1} parent=1 // pred_region
      _
    $region21: #{tpu_custom_call.1} parent=1 // pred_fallthru
      _
    // Predicated region
    $region22: #{tpu_custom_call.1} parent=1 // pred_check
      _
    $region23: #{tpu_custom_call.1} parent=1 // pred_check_branch
      %28 = sbr.rel (0) target = $region25
    $region24: #{tpu_custom_call.1} parent=1 // pred_region
      _
    $region25: #{tpu_custom_call.1} parent=1 // pred_fallthru
      _
    // Predicated region
    $region26: #{tpu_custom_call.1} parent=1 // pred_check
      _
    $region27: #{tpu_custom_call.1} parent=1 // pred_check_branch
      %30 = sbr.rel (0) target = $region29
    $region28: #{tpu_custom_call.1} parent=1 // pred_region
      _
    $region29: #{tpu_custom_call.1} parent=1 // pred_fallthru
      _
    // Predicated region
    $region30: #{tpu_custom_call.1} parent=1 // pred_check
      _
    $region31: #{tpu_custom_call.1} parent=1 // pred_check_branch
      %32 = sbr.rel (0) target = $region33
    $region32: #{tpu_custom_call.1} parent=1 // pred_region
      _
    $region33: #{tpu_custom_call.1} parent=1 // pred_fallthru
      _
    // Predicated region
    $region34: #{tpu_custom_call.1} parent=1 // pred_check
      _
    $region35: #{tpu_custom_call.1} parent=1 // pred_check_branch
      %34 = sbr.rel (0) target = $region37
    $region36: #{tpu_custom_call.1} parent=1 // pred_region
      _
    $region37: #{tpu_custom_call.1} parent=1 // pred_fallthru
      _
    %v36 = vld [vmem:[%s1] sm:$0xff]
    %v37 = vld [vmem:[%s1 + $0x8] sm:$0xff]
    %v38 = vld [vmem:[%s1 + $0x10] sm:$0xff]
    %v39 = vld [vmem:[%s1 + $0x18] sm:$0xff]
    %v40 = vld [vmem:[%s1 + $0x20] sm:$0xff]
    %v41 = vld [vmem:[%s1 + $0x28] sm:$0xff]
    %v42 = vld [vmem:[%s1 + $0x30] sm:$0xff]
    %v43 = vld [vmem:[%s1 + $0x38] sm:$0xff]
    %v44 = vld [vmem:[%s1 + $0x40] sm:$0xff]
    %v45 = vld [vmem:[%s1 + $0x48] sm:$0xff]
    %v46 = vld [vmem:[%s1 + $0x50] sm:$0xff]
    %v47 = vld [vmem:[%s1 + $0x58] sm:$0xff]
    %v48 = vld [vmem:[%s1 + $0x60] sm:$0xff]
    %v49 = vld [vmem:[%s1 + $0x68] sm:$0xff]
    %v50 = vld [vmem:[%s1 + $0x70] sm:$0xff]
    %v51 = vld [vmem:[%s1 + $0x78] sm:$0xff]
    %v52 = vld [vmem:[%s1 + $0x80] sm:$0xff]
    %v53 = vld [vmem:[%s1 + $0x88] sm:$0xff]
    %v54 = vld [vmem:[%s1 + $0x90] sm:$0xff]
    %v55 = vld [vmem:[%s1 + $0x98] sm:$0xff]
    %v56 = vld [vmem:[%s1 + $0xa0] sm:$0xff]
    %v57 = vld [vmem:[%s1 + $0xa8] sm:$0xff]
    %v58 = vld [vmem:[%s1 + $0xb0] sm:$0xff]
    %v59 = vld [vmem:[%s1 + $0xb8] sm:$0xff]
    %v60 = vld [vmem:[%s1 + $0xc0] sm:$0xff]
    %v61 = vld [vmem:[%s1 + $0xc8] sm:$0xff]
    %v62 = vld [vmem:[%s1 + $0xd0] sm:$0xff]
    %v63 = vld [vmem:[%s1 + $0xd8] sm:$0xff]
    %v64 = vld [vmem:[%s1 + $0xe0] sm:$0xff]
    %v65 = vld [vmem:[%s1 + $0xe8] sm:$0xff]
    %v66 = vld [vmem:[%s1 + $0xf0] sm:$0xff]
    %v67 = vld [vmem:[%s1 + $0xf8] sm:$0xff]
    %v68 = vlaneseq
    %v69 = vand.u32 %v68, 127
    %70 = vset.pattern.permute.xlu0 0
    %71 = vperm.xlu0 %70, %v36
    %v72 = vpop.permute.xlu0 %71
    %73 = vset.pattern.permute.xlu0 0
    %74 = vperm.xlu0 %73, %v37
    %v75 = vpop.permute.xlu0 %74
    %76 = vset.pattern.permute.xlu0 0
    %77 = vperm.xlu0 %76, %v38
    %v78 = vpop.permute.xlu0 %77
    %79 = vset.pattern.permute.xlu0 0
    %80 = vperm.xlu0 %79, %v39
    %v81 = vpop.permute.xlu0 %80
    %82 = vset.pattern.permute.xlu0 0
    %83 = vperm.xlu0 %82, %v40
    %v84 = vpop.permute.xlu0 %83
    %85 = vset.pattern.permute.xlu0 0
    %86 = vperm.xlu0 %85, %v41
    %v87 = vpop.permute.xlu0 %86
    %88 = vset.pattern.permute.xlu0 0
    %89 = vperm.xlu0 %88, %v42
    %v90 = vpop.permute.xlu0 %89
    %91 = vset.pattern.permute.xlu0 0
    %92 = vperm.xlu0 %91, %v43
    %v93 = vpop.permute.xlu0 %92
    %94 = vset.pattern.permute.xlu0 0
    %95 = vperm.xlu0 %94, %v44
    %v96 = vpop.permute.xlu0 %95
    %97 = vset.pattern.permute.xlu0 0
    %98 = vperm.xlu0 %97, %v45
    %v99 = vpop.permute.xlu0 %98
    %100 = vset.pattern.permute.xlu0 0
    %101 = vperm.xlu0 %100, %v46
    %v102 = vpop.permute.xlu0 %101
    %103 = vset.pattern.permute.xlu0 0
    %104 = vperm.xlu0 %103, %v47
    %v105 = vpop.permute.xlu0 %104
    %106 = vset.pattern.permute.xlu0 0
    %107 = vperm.xlu0 %106, %v48
    %v108 = vpop.permute.xlu0 %107
    %109 = vset.pattern.permute.xlu0 0
    %110 = vperm.xlu0 %109, %v49
    %v111 = vpop.permute.xlu0 %110
    %112 = vset.pattern.permute.xlu0 0
    %113 = vperm.xlu0 %112, %v50
    %v114 = vpop.permute.xlu0 %113
    %115 = vset.pattern.permute.xlu0 0
    %116 = vperm.xlu0 %115, %v51
    %v117 = vpop.permute.xlu0 %116
    %118 = vset.pattern.permute.xlu0 0
    %119 = vperm.xlu0 %118, %v52
    %v120 = vpop.permute.xlu0 %119
    %121 = vset.pattern.permute.xlu0 0
    %122 = vperm.xlu0 %121, %v53
    %v123 = vpop.permute.xlu0 %122
    %124 = vset.pattern.permute.xlu0 0
    %125 = vperm.xlu0 %124, %v54
    %v126 = vpop.permute.xlu0 %125
    %127 = vset.pattern.permute.xlu0 0
    %128 = vperm.xlu0 %127, %v55
    %v129 = vpop.permute.xlu0 %128
    %130 = vset.pattern.permute.xlu0 0
    %131 = vperm.xlu0 %130, %v56
    %v132 = vpop.permute.xlu0 %131
    %133 = vset.pattern.permute.xlu0 0
    %134 = vperm.xlu0 %133, %v57
    %v135 = vpop.permute.xlu0 %134
    %136 = vset.pattern.permute.xlu0 0
    %137 = vperm.xlu0 %136, %v58
    %v138 = vpop.permute.xlu0 %137
    %139 = vset.pattern.permute.xlu0 0
    %140 = vperm.xlu0 %139, %v59
    %v141 = vpop.permute.xlu0 %140
    %142 = vset.pattern.permute.xlu0 0
    %143 = vperm.xlu0 %142, %v60
    %v144 = vpop.permute.xlu0 %143
    %145 = vset.pattern.permute.xlu0 0
    %146 = vperm.xlu0 %145, %v61
    %v147 = vpop.permute.xlu0 %146
    %148 = vset.pattern.permute.xlu0 0
    %149 = vperm.xlu0 %148, %v62
    %v150 = vpop.permute.xlu0 %149
    %151 = vset.pattern.permute.xlu0 0
    %152 = vperm.xlu0 %151, %v63
    %v153 = vpop.permute.xlu0 %152
    %154 = vset.pattern.permute.xlu0 0
    %155 = vperm.xlu0 %154, %v64
    %v156 = vpop.permute.xlu0 %155
    %157 = vset.pattern.permute.xlu0 0
    %158 = vperm.xlu0 %157, %v65
    %v159 = vpop.permute.xlu0 %158
    %160 = vset.pattern.permute.xlu0 0
    %161 = vperm.xlu0 %160, %v66
    %v162 = vpop.permute.xlu0 %161
    %163 = vset.pattern.permute.xlu0 0
    %164 = vperm.xlu0 %163, %v67
    %v165 = vpop.permute.xlu0 %164
    %vm166 = vcmp.eq.s32.totalorder %v69, %v72
    %vm167 = vcmp.eq.s32.totalorder %v69, %v75
    %vm168 = vcmp.eq.s32.totalorder %v69, %v78
    %vm169 = vcmp.eq.s32.totalorder %v69, %v81
    %vm170 = vcmp.eq.s32.totalorder %v69, %v84
    %vm171 = vcmp.eq.s32.totalorder %v69, %v87
    %vm172 = vcmp.eq.s32.totalorder %v69, %v90
    %vm173 = vcmp.eq.s32.totalorder %v69, %v93
    %vm174 = vcmp.eq.s32.totalorder %v69, %v96
    %vm175 = vcmp.eq.s32.totalorder %v69, %v99
    %vm176 = vcmp.eq.s32.totalorder %v69, %v102
    %vm177 = vcmp.eq.s32.totalorder %v69, %v105
    %vm178 = vcmp.eq.s32.totalorder %v69, %v108
    %vm179 = vcmp.eq.s32.totalorder %v69, %v111
    %vm180 = vcmp.eq.s32.totalorder %v69, %v114
    %vm181 = vcmp.eq.s32.totalorder %v69, %v117
    %vm182 = vcmp.eq.s32.totalorder %v69, %v120
    %vm183 = vcmp.eq.s32.totalorder %v69, %v123
    %vm184 = vcmp.eq.s32.totalorder %v69, %v126
    %vm185 = vcmp.eq.s32.totalorder %v69, %v129
    %vm186 = vcmp.eq.s32.totalorder %v69, %v132
    %vm187 = vcmp.eq.s32.totalorder %v69, %v135
    %vm188 = vcmp.eq.s32.totalorder %v69, %v138
    %vm189 = vcmp.eq.s32.totalorder %v69, %v141
    %vm190 = vcmp.eq.s32.totalorder %v69, %v144
    %vm191 = vcmp.eq.s32.totalorder %v69, %v147
    %vm192 = vcmp.eq.s32.totalorder %v69, %v150
    %vm193 = vcmp.eq.s32.totalorder %v69, %v153
    %vm194 = vcmp.eq.s32.totalorder %v69, %v156
    %vm195 = vcmp.eq.s32.totalorder %v69, %v159
    %vm196 = vcmp.eq.s32.totalorder %v69, %v162
    %vm197 = vcmp.eq.s32.totalorder %v69, %v165
    %v198 = vsel %vm166, 1, 0
    %v199 = vsel %vm167, 1, 0
    %v200 = vsel %vm168, 1, 0
    %v201 = vsel %vm169, 1, 0
    %v202 = vsel %vm170, 1, 0
    %v203 = vsel %vm171, 1, 0
    %v204 = vsel %vm172, 1, 0
    %v205 = vsel %vm173, 1, 0
    %v206 = vsel %vm174, 1, 0
    %v207 = vsel %vm175, 1, 0
    %v208 = vsel %vm176, 1, 0
    %v209 = vsel %vm177, 1, 0
    %v210 = vsel %vm178, 1, 0
    %v211 = vsel %vm179, 1, 0
    %v212 = vsel %vm180, 1, 0
    %v213 = vsel %vm181, 1, 0
    %v214 = vsel %vm182, 1, 0
    %v215 = vsel %vm183, 1, 0
    %v216 = vsel %vm184, 1, 0
    %v217 = vsel %vm185, 1, 0
    %v218 = vsel %vm186, 1, 0
    %v219 = vsel %vm187, 1, 0
    %v220 = vsel %vm188, 1, 0
    %v221 = vsel %vm189, 1, 0
    %v222 = vsel %vm190, 1, 0
    %v223 = vsel %vm191, 1, 0
    %v224 = vsel %vm192, 1, 0
    %v225 = vsel %vm193, 1, 0
    %v226 = vsel %vm194, 1, 0
    %v227 = vsel %vm195, 1, 0
    %v228 = vsel %vm196, 1, 0
    %v229 = vsel %vm197, 1, 0
    %v230 = vcvt.s32.f32 %v198
    %v231 = vcvt.s32.f32 %v199
    %v232 = vcvt.s32.f32 %v200
    %v233 = vcvt.s32.f32 %v201
    %v234 = vcvt.s32.f32 %v202
    %v235 = vcvt.s32.f32 %v203
    %v236 = vcvt.s32.f32 %v204
    %v237 = vcvt.s32.f32 %v205
    %v238 = vcvt.s32.f32 %v206
    %v239 = vcvt.s32.f32 %v207
    %v240 = vcvt.s32.f32 %v208
    %v241 = vcvt.s32.f32 %v209
    %v242 = vcvt.s32.f32 %v210
    %v243 = vcvt.s32.f32 %v211
    %v244 = vcvt.s32.f32 %v212
    %v245 = vcvt.s32.f32 %v213
    %v246 = vcvt.s32.f32 %v214
    %v247 = vcvt.s32.f32 %v215
    %v248 = vcvt.s32.f32 %v216
    %v249 = vcvt.s32.f32 %v217
    %v250 = vcvt.s32.f32 %v218
    %v251 = vcvt.s32.f32 %v219
    %v252 = vcvt.s32.f32 %v220
    %v253 = vcvt.s32.f32 %v221
    %v254 = vcvt.s32.f32 %v222
    %v255 = vcvt.s32.f32 %v223
    %v256 = vcvt.s32.f32 %v224
    %v257 = vcvt.s32.f32 %v225
    %v258 = vcvt.s32.f32 %v226
    %v259 = vcvt.s32.f32 %v227
    %v260 = vcvt.s32.f32 %v228
    %v261 = vcvt.s32.f32 %v229
    %v262 = vpack.c.bf16 %v231, %v230
    %v263 = vpack.c.bf16 %v233, %v232
    %v264 = vpack.c.bf16 %v235, %v234
    %v265 = vpack.c.bf16 %v237, %v236
    %v266 = vpack.c.bf16 %v239, %v238
    %v267 = vpack.c.bf16 %v241, %v240
    %v268 = vpack.c.bf16 %v243, %v242
    %v269 = vpack.c.bf16 %v245, %v244
    %v270 = vpack.c.bf16 %v247, %v246
    %v271 = vpack.c.bf16 %v249, %v248
    %v272 = vpack.c.bf16 %v251, %v250
    %v273 = vpack.c.bf16 %v253, %v252
    %v274 = vpack.c.bf16 %v255, %v254
    %v275 = vpack.c.bf16 %v257, %v256
    %v276 = vpack.c.bf16 %v259, %v258
    %v277 = vpack.c.bf16 %v261, %v260
    %v278 = vld [vmem:[%s0] sm:$0xf]
    %v279 = vld [vmem:[%s0 + $0x4] sm:$0xf]
    %v280 = vld [vmem:[%s0 + $0x8] sm:$0xf]
    %v281 = vld [vmem:[%s0 + $0xc] sm:$0xf]
    %v282 = vld [vmem:[%s0 + $0x10] sm:$0xf]
    %v283 = vld [vmem:[%s0 + $0x14] sm:$0xf]
    %v284 = vld [vmem:[%s0 + $0x18] sm:$0xf]
    %v285 = vld [vmem:[%s0 + $0x1c] sm:$0xf]
    %v286 = vld [vmem:[%s0 + $0x20] sm:$0xf]
    %v287 = vld [vmem:[%s0 + $0x24] sm:$0xf]
    %v288 = vld [vmem:[%s0 + $0x28] sm:$0xf]
    %v289 = vld [vmem:[%s0 + $0x2c] sm:$0xf]
    %v290 = vld [vmem:[%s0 + $0x30] sm:$0xf]
    %v291 = vld [vmem:[%s0 + $0x34] sm:$0xf]
    %v292 = vld [vmem:[%s0 + $0x38] sm:$0xf]
    %v293 = vld [vmem:[%s0 + $0x3c] sm:$0xf]
    %v294 = vld [vmem:[%s0 + $0x40] sm:$0xf]
    %v295 = vld [vmem:[%s0 + $0x44] sm:$0xf]
    %v296 = vld [vmem:[%s0 + $0x48] sm:$0xf]
    %v297 = vld [vmem:[%s0 + $0x4c] sm:$0xf]
    %v298 = vld [vmem:[%s0 + $0x50] sm:$0xf]
    %v299 = vld [vmem:[%s0 + $0x54] sm:$0xf]
    %v300 = vld [vmem:[%s0 + $0x58] sm:$0xf]
    %v301 = vld [vmem:[%s0 + $0x5c] sm:$0xf]
    %v302 = vld [vmem:[%s0 + $0x60] sm:$0xf]
    %v303 = vld [vmem:[%s0 + $0x64] sm:$0xf]
    %v304 = vld [vmem:[%s0 + $0x68] sm:$0xf]
    %v305 = vld [vmem:[%s0 + $0x6c] sm:$0xf]
    %v306 = vld [vmem:[%s0 + $0x70] sm:$0xf]
    %v307 = vld [vmem:[%s0 + $0x74] sm:$0xf]
    %v308 = vld [vmem:[%s0 + $0x78] sm:$0xf]
    %v309 = vld [vmem:[%s0 + $0x7c] sm:$0xf]
    %v310 = vld [vmem:[%s3] sm:$0xff]
    %v311 = vld [vmem:[%s3 + $0x8] sm:$0xff]
    %v312 = vld [vmem:[%s2] sm:$0x77]
    %v314 = vunpack.c.l.b16 %v312
    %v315 = vunpack.c.h.b16 %v312
    %v316 = vpack.c.b16 %v314, %v314
    %v317 = vpack.c.b16 %v315, %v315
    %vm318 = vcmask 48128
    %v320 = vsel %vm318, %v262, 0
    %v323 = vsel %vm318, %v263, 0
    %v326 = vsel %vm318, %v264, 0
    %v329 = vsel %vm318, %v265, 0
    %v332 = vsel %vm318, %v266, 0
    %v335 = vsel %vm318, %v267, 0
    %v338 = vsel %vm318, %v268, 0
    %v341 = vsel %vm318, %v269, 0
    %v344 = vsel %vm318, %v270, 0
    %v347 = vsel %vm318, %v271, 0
    %v350 = vsel %vm318, %v272, 0
    %v353 = vsel %vm318, %v273, 0
    %v356 = vsel %vm318, %v274, 0
    %v359 = vsel %vm318, %v275, 0
    %v362 = vsel %vm318, %v276, 0
    %v365 = vsel %vm318, %v277, 0
    %vm367 = vcmask 1042432
    %v369 = vsel %vm367, %v316, 0
    %v372 = vsel %vm367, %v317, 0
    %374 = vmatpush.bf16.msra.mxu0 0
    %375 = vmatpush.bf16.msra.mxu0 0
    %376 = vmatpush.bf16.msra.mxu0 0
    %377 = vmatpush.bf16.msra.mxu0 0
    %378 = vmatpush.bf16.msra.mxu0 0
    %379 = vmatpush.bf16.msra.mxu0 0
    %380 = vmatpush.bf16.msra.mxu0 0
    %381 = vmatpush.bf16.msra.mxu0 %v369
    %382 = vmatmul.bf16.gmra.mxu0 %v320
    %v383 = vpop.f32.mrf.mxu0
    %v384 = vadd.f32 0.0, %v383
    %v385 = vpop.f32.mrf.mxu0
    %v386 = vadd.f32 0.0, %v385
    %387 = vmatmul.bf16.gmra.mxu0 %v323
    %v388 = vpop.f32.mrf.mxu0
    %v389 = vadd.f32 0.0, %v388
    %v390 = vpop.f32.mrf.mxu0
    %v391 = vadd.f32 0.0, %v390
    %392 = vmatmul.bf16.gmra.mxu0 %v326
    %v393 = vpop.f32.mrf.mxu0
    %v394 = vadd.f32 0.0, %v393
    %v395 = vpop.f32.mrf.mxu0
    %v396 = vadd.f32 0.0, %v395
    %397 = vmatmul.bf16.gmra.mxu0 %v329
    %v398 = vpop.f32.mrf.mxu0
    %v399 = vadd.f32 0.0, %v398
    %v400 = vpop.f32.mrf.mxu0
    %v401 = vadd.f32 0.0, %v400
    %402 = vmatmul.bf16.gmra.mxu0 %v332
    %v403 = vpop.f32.mrf.mxu0
    %v404 = vadd.f32 0.0, %v403
    %v405 = vpop.f32.mrf.mxu0
    %v406 = vadd.f32 0.0, %v405
    %407 = vmatmul.bf16.gmra.mxu0 %v335
    %v408 = vpop.f32.mrf.mxu0
    %v409 = vadd.f32 0.0, %v408
    %v410 = vpop.f32.mrf.mxu0
    %v411 = vadd.f32 0.0, %v410
    %412 = vmatmul.bf16.gmra.mxu0 %v338
    %v413 = vpop.f32.mrf.mxu0
    %v414 = vadd.f32 0.0, %v413
    %v415 = vpop.f32.mrf.mxu0
    %v416 = vadd.f32 0.0, %v415
    %417 = vmatmul.bf16.gmra.mxu0 %v341
    %v418 = vpop.f32.mrf.mxu0
    %v419 = vadd.f32 0.0, %v418
    %v420 = vpop.f32.mrf.mxu0
    %v421 = vadd.f32 0.0, %v420
    %422 = vmatmul.bf16.gmra.mxu0 %v344
    %v423 = vpop.f32.mrf.mxu0
    %v424 = vadd.f32 0.0, %v423
    %v425 = vpop.f32.mrf.mxu0
    %v426 = vadd.f32 0.0, %v425
    %427 = vmatmul.bf16.gmra.mxu0 %v347
    %v428 = vpop.f32.mrf.mxu0
    %v429 = vadd.f32 0.0, %v428
    %v430 = vpop.f32.mrf.mxu0
    %v431 = vadd.f32 0.0, %v430
    %432 = vmatmul.bf16.gmra.mxu0 %v350
    %v433 = vpop.f32.mrf.mxu0
    %v434 = vadd.f32 0.0, %v433
    %v435 = vpop.f32.mrf.mxu0
    %v436 = vadd.f32 0.0, %v435
    %437 = vmatmul.bf16.gmra.mxu0 %v353
    %v438 = vpop.f32.mrf.mxu0
    %v439 = vadd.f32 0.0, %v438
    %v440 = vpop.f32.mrf.mxu0
    %v441 = vadd.f32 0.0, %v440
    %442 = vmatmul.bf16.gmra.mxu0 %v356
    %v443 = vpop.f32.mrf.mxu0
    %v444 = vadd.f32 0.0, %v443
    %v445 = vpop.f32.mrf.mxu0
    %v446 = vadd.f32 0.0, %v445
    %447 = vmatmul.bf16.gmra.mxu0 %v359
    %v448 = vpop.f32.mrf.mxu0
    %v449 = vadd.f32 0.0, %v448
    %v450 = vpop.f32.mrf.mxu0
    %v451 = vadd.f32 0.0, %v450
    %452 = vmatmul.bf16.gmra.mxu0 %v362
    %v453 = vpop.f32.mrf.mxu0
    %v454 = vadd.f32 0.0, %v453
    %v455 = vpop.f32.mrf.mxu0
    %v456 = vadd.f32 0.0, %v455
    %457 = vmatmul.bf16.gmra.mxu0 %v365
    %v458 = vpop.f32.mrf.mxu0
    %v459 = vadd.f32 0.0, %v458
    %v460 = vpop.f32.mrf.mxu0
    %v461 = vadd.f32 0.0, %v460
    %462 = vdwg.mxu0
    %463 = vmatpush.bf16.msra.mxu0 0
    %464 = vmatpush.bf16.msra.mxu0 0
    %465 = vmatpush.bf16.msra.mxu0 0
    %466 = vmatpush.bf16.msra.mxu0 0
    %467 = vmatpush.bf16.msra.mxu0 0
    %468 = vmatpush.bf16.msra.mxu0 0
    %469 = vmatpush.bf16.msra.mxu0 0
    %470 = vmatpush.bf16.msra.mxu0 %v372
    %471 = vmatmul.bf16.gmra.mxu0 %v320
    %v472 = vpop.f32.mrf.mxu0
    %v473 = vadd.f32 0.0, %v472
    %v474 = vpop.f32.mrf.mxu0
    %v475 = vadd.f32 0.0, %v474
    %476 = vmatmul.bf16.gmra.mxu0 %v323
    %v477 = vpop.f32.mrf.mxu0
    %v478 = vadd.f32 0.0, %v477
    %v479 = vpop.f32.mrf.mxu0
    %v480 = vadd.f32 0.0, %v479
    %481 = vmatmul.bf16.gmra.mxu0 %v326
    %v482 = vpop.f32.mrf.mxu0
    %v483 = vadd.f32 0.0, %v482
    %v484 = vpop.f32.mrf.mxu0
    %v485 = vadd.f32 0.0, %v484
    %486 = vmatmul.bf16.gmra.mxu0 %v329
    %v487 = vpop.f32.mrf.mxu0
    %v488 = vadd.f32 0.0, %v487
    %v489 = vpop.f32.mrf.mxu0
    %v490 = vadd.f32 0.0, %v489
    %491 = vmatmul.bf16.gmra.mxu0 %v332
    %v492 = vpop.f32.mrf.mxu0
    %v493 = vadd.f32 0.0, %v492
    %v494 = vpop.f32.mrf.mxu0
    %v495 = vadd.f32 0.0, %v494
    %496 = vmatmul.bf16.gmra.mxu0 %v335
    %v497 = vpop.f32.mrf.mxu0
    %v498 = vadd.f32 0.0, %v497
    %v499 = vpop.f32.mrf.mxu0
    %v500 = vadd.f32 0.0, %v499
    %501 = vmatmul.bf16.gmra.mxu0 %v338
    %v502 = vpop.f32.mrf.mxu0
    %v503 = vadd.f32 0.0, %v502
    %v504 = vpop.f32.mrf.mxu0
    %v505 = vadd.f32 0.0, %v504
    %506 = vmatmul.bf16.gmra.mxu0 %v341
    %v507 = vpop.f32.mrf.mxu0
    %v508 = vadd.f32 0.0, %v507
    %v509 = vpop.f32.mrf.mxu0
    %v510 = vadd.f32 0.0, %v509
    %511 = vmatmul.bf16.gmra.mxu0 %v344
    %v512 = vpop.f32.mrf.mxu0
    %v513 = vadd.f32 0.0, %v512
    %v514 = vpop.f32.mrf.mxu0
    %v515 = vadd.f32 0.0, %v514
    %516 = vmatmul.bf16.gmra.mxu0 %v347
    %v517 = vpop.f32.mrf.mxu0
    %v518 = vadd.f32 0.0, %v517
    %v519 = vpop.f32.mrf.mxu0
    %v520 = vadd.f32 0.0, %v519
    %521 = vmatmul.bf16.gmra.mxu0 %v350
    %v522 = vpop.f32.mrf.mxu0
    %v523 = vadd.f32 0.0, %v522
    %v524 = vpop.f32.mrf.mxu0
    %v525 = vadd.f32 0.0, %v524
    %526 = vmatmul.bf16.gmra.mxu0 %v353
    %v527 = vpop.f32.mrf.mxu0
    %v528 = vadd.f32 0.0, %v527
    %v529 = vpop.f32.mrf.mxu0
    %v530 = vadd.f32 0.0, %v529
    %531 = vmatmul.bf16.gmra.mxu0 %v356
    %v532 = vpop.f32.mrf.mxu0
    %v533 = vadd.f32 0.0, %v532
    %v534 = vpop.f32.mrf.mxu0
    %v535 = vadd.f32 0.0, %v534
    %536 = vmatmul.bf16.gmra.mxu0 %v359
    %v537 = vpop.f32.mrf.mxu0
    %v538 = vadd.f32 0.0, %v537
    %v539 = vpop.f32.mrf.mxu0
    %v540 = vadd.f32 0.0, %v539
    %541 = vmatmul.bf16.gmra.mxu0 %v362
    %v542 = vpop.f32.mrf.mxu0
    %v543 = vadd.f32 0.0, %v542
    %v544 = vpop.f32.mrf.mxu0
    %v545 = vadd.f32 0.0, %v544
    %546 = vmatmul.bf16.gmra.mxu0 %v365
    %v547 = vpop.f32.mrf.mxu0
    %v548 = vadd.f32 0.0, %v547
    %v549 = vpop.f32.mrf.mxu0
    %v550 = vadd.f32 0.0, %v549
    %551 = vdwg.mxu0
    %v584 = vunpack.c.l.b16 %v278
    %v585 = vunpack.c.l.b16 %v279
    %v586 = vunpack.c.l.b16 %v280
    %v587 = vunpack.c.l.b16 %v281
    %v588 = vunpack.c.l.b16 %v282
    %v589 = vunpack.c.l.b16 %v283
    %v590 = vunpack.c.l.b16 %v284
    %v591 = vunpack.c.l.b16 %v285
    %v592 = vunpack.c.l.b16 %v286
    %v593 = vunpack.c.l.b16 %v287
    %v594 = vunpack.c.l.b16 %v288
    %v595 = vunpack.c.l.b16 %v289
    %v596 = vunpack.c.l.b16 %v290
    %v597 = vunpack.c.l.b16 %v291
    %v598 = vunpack.c.l.b16 %v292
    %v599 = vunpack.c.l.b16 %v293
    %v600 = vunpack.c.l.b16 %v294
    %v601 = vunpack.c.l.b16 %v295
    %v602 = vunpack.c.l.b16 %v296
    %v603 = vunpack.c.l.b16 %v297
    %v604 = vunpack.c.l.b16 %v298
    %v605 = vunpack.c.l.b16 %v299
    %v606 = vunpack.c.l.b16 %v300
    %v607 = vunpack.c.l.b16 %v301
    %v608 = vunpack.c.l.b16 %v302
    %v609 = vunpack.c.l.b16 %v303
    %v610 = vunpack.c.l.b16 %v304
    %v611 = vunpack.c.l.b16 %v305
    %v612 = vunpack.c.l.b16 %v306
    %v613 = vunpack.c.l.b16 %v307
    %v614 = vunpack.c.l.b16 %v308
    %v615 = vunpack.c.l.b16 %v309
    %v616 = vpack.c.b16 %v585, %v584
    %v617 = vpack.c.b16 %v587, %v586
    %v618 = vpack.c.b16 %v589, %v588
    %v619 = vpack.c.b16 %v591, %v590
    %v620 = vpack.c.b16 %v593, %v592
    %v621 = vpack.c.b16 %v595, %v594
    %v622 = vpack.c.b16 %v597, %v596
    %v623 = vpack.c.b16 %v599, %v598
    %v624 = vpack.c.b16 %v601, %v600
    %v625 = vpack.c.b16 %v603, %v602
    %v626 = vpack.c.b16 %v605, %v604
    %v627 = vpack.c.b16 %v607, %v606
    %v628 = vpack.c.b16 %v609, %v608
    %v629 = vpack.c.b16 %v611, %v610
    %v630 = vpack.c.b16 %v613, %v612
    %v631 = vpack.c.b16 %v615, %v614
    %v634 = vunpack.c.l.b16 %v310
    %v635 = vunpack.c.h.b16 %v310
    %v636 = vunpack.c.l.b16 %v311
    %v637 = vunpack.c.h.b16 %v311
    %v638 = vpack.c.b16 %v636, %v634
    %v639 = vpack.c.b16 %v637, %v635
    %vm642 = vcmask 130048
    %v644 = vsel %vm642, %v616, 0
    %v647 = vsel %vm642, %v617, 0
    %v650 = vsel %vm642, %v618, 0
    %v653 = vsel %vm642, %v619, 0
    %v656 = vsel %vm642, %v620, 0
    %v659 = vsel %vm642, %v621, 0
    %v662 = vsel %vm642, %v622, 0
    %v665 = vsel %vm642, %v623, 0
    %v668 = vsel %vm642, %v624, 0
    %v671 = vsel %vm642, %v625, 0
    %v674 = vsel %vm642, %v626, 0
    %v677 = vsel %vm642, %v627, 0
    %v680 = vsel %vm642, %v628, 0
    %v683 = vsel %vm642, %v629, 0
    %v686 = vsel %vm642, %v630, 0
    %v689 = vsel %vm642, %v631, 0
    %691 = vmatpush.bf16.msra.mxu0 0
    %692 = vmatpush.bf16.msra.mxu0 0
    %693 = vmatpush.bf16.msra.mxu0 0
    %694 = vmatpush.bf16.msra.mxu0 0
    %695 = vmatpush.bf16.msra.mxu0 0
    %696 = vmatpush.bf16.msra.mxu0 0
    %697 = vmatpush.bf16.msra.mxu0 0
    %698 = vmatpush.bf16.msra.mxu0 %v638
    %699 = vmatmul.bf16.gmra.mxu0 %v644
    %v700 = vpop.f32.mrf.mxu0
    %v701 = vadd.f32 %v384, %v700
    %v702 = vpop.f32.mrf.mxu0
    %v703 = vadd.f32 %v386, %v702
    %704 = vmatmul.bf16.gmra.mxu0 %v647
    %v705 = vpop.f32.mrf.mxu0
    %v706 = vadd.f32 %v389, %v705
    %v707 = vpop.f32.mrf.mxu0
    %v708 = vadd.f32 %v391, %v707
    %709 = vmatmul.bf16.gmra.mxu0 %v650
    %v710 = vpop.f32.mrf.mxu0
    %v711 = vadd.f32 %v394, %v710
    %v712 = vpop.f32.mrf.mxu0
    %v713 = vadd.f32 %v396, %v712
    %714 = vmatmul.bf16.gmra.mxu0 %v653
    %v715 = vpop.f32.mrf.mxu0
    %v716 = vadd.f32 %v399, %v715
    %v717 = vpop.f32.mrf.mxu0
    %v718 = vadd.f32 %v401, %v717
    %719 = vmatmul.bf16.gmra.mxu0 %v656
    %v720 = vpop.f32.mrf.mxu0
    %v721 = vadd.f32 %v404, %v720
    %v722 = vpop.f32.mrf.mxu0
    %v723 = vadd.f32 %v406, %v722
    %724 = vmatmul.bf16.gmra.mxu0 %v659
    %v725 = vpop.f32.mrf.mxu0
    %v726 = vadd.f32 %v409, %v725
    %v727 = vpop.f32.mrf.mxu0
    %v728 = vadd.f32 %v411, %v727
    %729 = vmatmul.bf16.gmra.mxu0 %v662
    %v730 = vpop.f32.mrf.mxu0
    %v731 = vadd.f32 %v414, %v730
    %v732 = vpop.f32.mrf.mxu0
    %v733 = vadd.f32 %v416, %v732
    %734 = vmatmul.bf16.gmra.mxu0 %v665
    %v735 = vpop.f32.mrf.mxu0
    %v736 = vadd.f32 %v419, %v735
    %v737 = vpop.f32.mrf.mxu0
    %v738 = vadd.f32 %v421, %v737
    %739 = vmatmul.bf16.gmra.mxu0 %v668
    %v740 = vpop.f32.mrf.mxu0
    %v741 = vadd.f32 %v424, %v740
    %v742 = vpop.f32.mrf.mxu0
    %v743 = vadd.f32 %v426, %v742
    %744 = vmatmul.bf16.gmra.mxu0 %v671
    %v745 = vpop.f32.mrf.mxu0
    %v746 = vadd.f32 %v429, %v745
    %v747 = vpop.f32.mrf.mxu0
    %v748 = vadd.f32 %v431, %v747
    %749 = vmatmul.bf16.gmra.mxu0 %v674
    %v750 = vpop.f32.mrf.mxu0
    %v751 = vadd.f32 %v434, %v750
    %v752 = vpop.f32.mrf.mxu0
    %v753 = vadd.f32 %v436, %v752
    %754 = vmatmul.bf16.gmra.mxu0 %v677
    %v755 = vpop.f32.mrf.mxu0
    %v756 = vadd.f32 %v439, %v755
    %v757 = vpop.f32.mrf.mxu0
    %v758 = vadd.f32 %v441, %v757
    %759 = vmatmul.bf16.gmra.mxu0 %v680
    %v760 = vpop.f32.mrf.mxu0
    %v761 = vadd.f32 %v444, %v760
    %v762 = vpop.f32.mrf.mxu0
    %v763 = vadd.f32 %v446, %v762
    %764 = vmatmul.bf16.gmra.mxu0 %v683
    %v765 = vpop.f32.mrf.mxu0
    %v766 = vadd.f32 %v449, %v765
    %v767 = vpop.f32.mrf.mxu0
    %v768 = vadd.f32 %v451, %v767
    %769 = vmatmul.bf16.gmra.mxu0 %v686
    %v770 = vpop.f32.mrf.mxu0
    %v771 = vadd.f32 %v454, %v770
    %v772 = vpop.f32.mrf.mxu0
    %v773 = vadd.f32 %v456, %v772
    %774 = vmatmul.bf16.gmra.mxu0 %v689
    %v775 = vpop.f32.mrf.mxu0
    %v776 = vadd.f32 %v459, %v775
    %v777 = vpop.f32.mrf.mxu0
    %v778 = vadd.f32 %v461, %v777
    %779 = vdwg.mxu0
    %780 = vmatpush.bf16.msra.mxu0 0
    %781 = vmatpush.bf16.msra.mxu0 0
    %782 = vmatpush.bf16.msra.mxu0 0
    %783 = vmatpush.bf16.msra.mxu0 0
    %784 = vmatpush.bf16.msra.mxu0 0
    %785 = vmatpush.bf16.msra.mxu0 0
    %786 = vmatpush.bf16.msra.mxu0 0
    %787 = vmatpush.bf16.msra.mxu0 %v639
    %788 = vmatmul.bf16.gmra.mxu0 %v644
    %v789 = vpop.f32.mrf.mxu0
    %v790 = vadd.f32 %v473, %v789
    %v791 = vpop.f32.mrf.mxu0
    %v792 = vadd.f32 %v475, %v791
    %793 = vmatmul.bf16.gmra.mxu0 %v647
    %v794 = vpop.f32.mrf.mxu0
    %v795 = vadd.f32 %v478, %v794
    %v796 = vpop.f32.mrf.mxu0
    %v797 = vadd.f32 %v480, %v796
    %798 = vmatmul.bf16.gmra.mxu0 %v650
    %v799 = vpop.f32.mrf.mxu0
    %v800 = vadd.f32 %v483, %v799
    %v801 = vpop.f32.mrf.mxu0
    %v802 = vadd.f32 %v485, %v801
    %803 = vmatmul.bf16.gmra.mxu0 %v653
    %v804 = vpop.f32.mrf.mxu0
    %v805 = vadd.f32 %v488, %v804
    %v806 = vpop.f32.mrf.mxu0
    %v807 = vadd.f32 %v490, %v806
    %808 = vmatmul.bf16.gmra.mxu0 %v656
    %v809 = vpop.f32.mrf.mxu0
    %v810 = vadd.f32 %v493, %v809
    %v811 = vpop.f32.mrf.mxu0
    %v812 = vadd.f32 %v495, %v811
    %813 = vmatmul.bf16.gmra.mxu0 %v659
    %v814 = vpop.f32.mrf.mxu0
    %v815 = vadd.f32 %v498, %v814
    %v816 = vpop.f32.mrf.mxu0
    %v817 = vadd.f32 %v500, %v816
    %818 = vmatmul.bf16.gmra.mxu0 %v662
    %v819 = vpop.f32.mrf.mxu0
    %v820 = vadd.f32 %v503, %v819
    %v821 = vpop.f32.mrf.mxu0
    %v822 = vadd.f32 %v505, %v821
    %823 = vmatmul.bf16.gmra.mxu0 %v665
    %v824 = vpop.f32.mrf.mxu0
    %v825 = vadd.f32 %v508, %v824
    %v826 = vpop.f32.mrf.mxu0
    %v827 = vadd.f32 %v510, %v826
    %828 = vmatmul.bf16.gmra.mxu0 %v668
    %v829 = vpop.f32.mrf.mxu0
    %v830 = vadd.f32 %v513, %v829
    %v831 = vpop.f32.mrf.mxu0
    %v832 = vadd.f32 %v515, %v831
    %833 = vmatmul.bf16.gmra.mxu0 %v671
    %v834 = vpop.f32.mrf.mxu0
    %v835 = vadd.f32 %v518, %v834
    %v836 = vpop.f32.mrf.mxu0
    %v837 = vadd.f32 %v520, %v836
    %838 = vmatmul.bf16.gmra.mxu0 %v674
    %v839 = vpop.f32.mrf.mxu0
    %v840 = vadd.f32 %v523, %v839
    %v841 = vpop.f32.mrf.mxu0
    %v842 = vadd.f32 %v525, %v841
    %843 = vmatmul.bf16.gmra.mxu0 %v677
    %v844 = vpop.f32.mrf.mxu0
    %v845 = vadd.f32 %v528, %v844
    %v846 = vpop.f32.mrf.mxu0
    %v847 = vadd.f32 %v530, %v846
    %848 = vmatmul.bf16.gmra.mxu0 %v680
    %v849 = vpop.f32.mrf.mxu0
    %v850 = vadd.f32 %v533, %v849
    %v851 = vpop.f32.mrf.mxu0
    %v852 = vadd.f32 %v535, %v851
    %853 = vmatmul.bf16.gmra.mxu0 %v683
    %v854 = vpop.f32.mrf.mxu0
    %v855 = vadd.f32 %v538, %v854
    %v856 = vpop.f32.mrf.mxu0
    %v857 = vadd.f32 %v540, %v856
    %858 = vmatmul.bf16.gmra.mxu0 %v686
    %v859 = vpop.f32.mrf.mxu0
    %v860 = vadd.f32 %v543, %v859
    %v861 = vpop.f32.mrf.mxu0
    %v862 = vadd.f32 %v545, %v861
    %863 = vmatmul.bf16.gmra.mxu0 %v689
    %v864 = vpop.f32.mrf.mxu0
    %v865 = vadd.f32 %v548, %v864
    %v866 = vpop.f32.mrf.mxu0
    %v867 = vadd.f32 %v550, %v866
    %868 = vdwg.mxu0
    %v869 = vld [vmem:[%s4] sm:$0x3]
    %v871 = vperm.slane %v869, 0
    %v872 = vperm.slane %v869, 1
    %v875 = vadd.f32 %v701, %v871
    %v876 = vadd.f32 %v790, %v872
    %v877 = vadd.f32 %v703, %v871
    %v878 = vadd.f32 %v792, %v872
    %v879 = vadd.f32 %v706, %v871
    %v880 = vadd.f32 %v795, %v872
    %v881 = vadd.f32 %v708, %v871
    %v882 = vadd.f32 %v797, %v872
    %v883 = vadd.f32 %v711, %v871
    %v884 = vadd.f32 %v800, %v872
    %v885 = vadd.f32 %v713, %v871
    %v886 = vadd.f32 %v802, %v872
    %v887 = vadd.f32 %v716, %v871
    %v888 = vadd.f32 %v805, %v872
    %v889 = vadd.f32 %v718, %v871
    %v890 = vadd.f32 %v807, %v872
    %v891 = vadd.f32 %v721, %v871
    %v892 = vadd.f32 %v810, %v872
    %v893 = vadd.f32 %v723, %v871
    %v894 = vadd.f32 %v812, %v872
    %v895 = vadd.f32 %v726, %v871
    %v896 = vadd.f32 %v815, %v872
    %v897 = vadd.f32 %v728, %v871
    %v898 = vadd.f32 %v817, %v872
    %v899 = vadd.f32 %v731, %v871
    %v900 = vadd.f32 %v820, %v872
    %v901 = vadd.f32 %v733, %v871
    %v902 = vadd.f32 %v822, %v872
    %v903 = vadd.f32 %v736, %v871
    %v904 = vadd.f32 %v825, %v872
    %v905 = vadd.f32 %v738, %v871
    %v906 = vadd.f32 %v827, %v872
    %v907 = vadd.f32 %v741, %v871
    %v908 = vadd.f32 %v830, %v872
    %v909 = vadd.f32 %v743, %v871
    %v910 = vadd.f32 %v832, %v872
    %v911 = vadd.f32 %v746, %v871
    %v912 = vadd.f32 %v835, %v872
    %v913 = vadd.f32 %v748, %v871
    %v914 = vadd.f32 %v837, %v872
    %v915 = vadd.f32 %v751, %v871
    %v916 = vadd.f32 %v840, %v872
    %v917 = vadd.f32 %v753, %v871
    %v918 = vadd.f32 %v842, %v872
    %v919 = vadd.f32 %v756, %v871
    %v920 = vadd.f32 %v845, %v872
    %v921 = vadd.f32 %v758, %v871
    %v922 = vadd.f32 %v847, %v872
    %v923 = vadd.f32 %v761, %v871
    %v924 = vadd.f32 %v850, %v872
    %v925 = vadd.f32 %v763, %v871
    %v926 = vadd.f32 %v852, %v872
    %v927 = vadd.f32 %v766, %v871
    %v928 = vadd.f32 %v855, %v872
    %v929 = vadd.f32 %v768, %v871
    %v930 = vadd.f32 %v857, %v872
    %v931 = vadd.f32 %v771, %v871
    %v932 = vadd.f32 %v860, %v872
    %v933 = vadd.f32 %v773, %v871
    %v934 = vadd.f32 %v862, %v872
    %v935 = vadd.f32 %v776, %v871
    %v936 = vadd.f32 %v865, %v872
    %v937 = vadd.f32 %v778, %v871
    %v938 = vadd.f32 %v867, %v872
    %v939 = vmax.f32 %v875, 0.0
    %v940 = vmax.f32 %v876, 0.0
    %v941 = vmax.f32 %v877, 0.0
    %v942 = vmax.f32 %v878, 0.0
    %v943 = vmax.f32 %v879, 0.0
    %v944 = vmax.f32 %v880, 0.0
    %v945 = vmax.f32 %v881, 0.0
    %v946 = vmax.f32 %v882, 0.0
    %v947 = vmax.f32 %v883, 0.0
    %v948 = vmax.f32 %v884, 0.0
    %v949 = vmax.f32 %v885, 0.0
    %v950 = vmax.f32 %v886, 0.0
    %v951 = vmax.f32 %v887, 0.0
    %v952 = vmax.f32 %v888, 0.0
    %v953 = vmax.f32 %v889, 0.0
    %v954 = vmax.f32 %v890, 0.0
    %v955 = vmax.f32 %v891, 0.0
    %v956 = vmax.f32 %v892, 0.0
    %v957 = vmax.f32 %v893, 0.0
    %v958 = vmax.f32 %v894, 0.0
    %v959 = vmax.f32 %v895, 0.0
    %v960 = vmax.f32 %v896, 0.0
    %v961 = vmax.f32 %v897, 0.0
    %v962 = vmax.f32 %v898, 0.0
    %v963 = vmax.f32 %v899, 0.0
    %v964 = vmax.f32 %v900, 0.0
    %v965 = vmax.f32 %v901, 0.0
    %v966 = vmax.f32 %v902, 0.0
    %v967 = vmax.f32 %v903, 0.0
    %v968 = vmax.f32 %v904, 0.0
    %v969 = vmax.f32 %v905, 0.0
    %v970 = vmax.f32 %v906, 0.0
    %v971 = vmax.f32 %v907, 0.0
    %v972 = vmax.f32 %v908, 0.0
    %v973 = vmax.f32 %v909, 0.0
    %v974 = vmax.f32 %v910, 0.0
    %v975 = vmax.f32 %v911, 0.0
    %v976 = vmax.f32 %v912, 0.0
    %v977 = vmax.f32 %v913, 0.0
    %v978 = vmax.f32 %v914, 0.0
    %v979 = vmax.f32 %v915, 0.0
    %v980 = vmax.f32 %v916, 0.0
    %v981 = vmax.f32 %v917, 0.0
    %v982 = vmax.f32 %v918, 0.0
    %v983 = vmax.f32 %v919, 0.0
    %v984 = vmax.f32 %v920, 0.0
    %v985 = vmax.f32 %v921, 0.0
    %v986 = vmax.f32 %v922, 0.0
    %v987 = vmax.f32 %v923, 0.0
    %v988 = vmax.f32 %v924, 0.0
    %v989 = vmax.f32 %v925, 0.0
    %v990 = vmax.f32 %v926, 0.0
    %v991 = vmax.f32 %v927, 0.0
    %v992 = vmax.f32 %v928, 0.0
    %v993 = vmax.f32 %v929, 0.0
    %v994 = vmax.f32 %v930, 0.0
    %v995 = vmax.f32 %v931, 0.0
    %v996 = vmax.f32 %v932, 0.0
    %v997 = vmax.f32 %v933, 0.0
    %v998 = vmax.f32 %v934, 0.0
    %v999 = vmax.f32 %v935, 0.0
    %v1000 = vmax.f32 %v936, 0.0
    %v1001 = vmax.f32 %v937, 0.0
    %v1002 = vmax.f32 %v938, 0.0
    %v1003 = vpack.c.bf16 %v941, %v939
    %v1004 = vpack.c.bf16 %v942, %v940
    %v1005 = vpack.c.bf16 %v945, %v943
    %v1006 = vpack.c.bf16 %v946, %v944
    %v1007 = vpack.c.bf16 %v949, %v947
    %v1008 = vpack.c.bf16 %v950, %v948
    %v1009 = vpack.c.bf16 %v953, %v951
    %v1010 = vpack.c.bf16 %v954, %v952
    %v1011 = vpack.c.bf16 %v957, %v955
    %v1012 = vpack.c.bf16 %v958, %v956
    %v1013 = vpack.c.bf16 %v961, %v959
    %v1014 = vpack.c.bf16 %v962, %v960
    %v1015 = vpack.c.bf16 %v965, %v963
    %v1016 = vpack.c.bf16 %v966, %v964
    %v1017 = vpack.c.bf16 %v969, %v967
    %v1018 = vpack.c.bf16 %v970, %v968
    %v1019 = vpack.c.bf16 %v973, %v971
    %v1020 = vpack.c.bf16 %v974, %v972
    %v1021 = vpack.c.bf16 %v977, %v975
    %v1022 = vpack.c.bf16 %v978, %v976
    %v1023 = vpack.c.bf16 %v981, %v979
    %v1024 = vpack.c.bf16 %v982, %v980
    %v1025 = vpack.c.bf16 %v985, %v983
    %v1026 = vpack.c.bf16 %v986, %v984
    %v1027 = vpack.c.bf16 %v989, %v987
    %v1028 = vpack.c.bf16 %v990, %v988
    %v1029 = vpack.c.bf16 %v993, %v991
    %v1030 = vpack.c.bf16 %v994, %v992
    %v1031 = vpack.c.bf16 %v997, %v995
    %v1032 = vpack.c.bf16 %v998, %v996
    %v1033 = vpack.c.bf16 %v1001, %v999
    %v1034 = vpack.c.bf16 %v1002, %v1000
    %v1035 = vld [vmem:[%s5] sm:$0xff]
    %v1036 = vld [vmem:[%s5 + $0x8] sm:$0xff]
    %v1037 = vld [vmem:[%s5 + $0x10] sm:$0xff]
    %v1038 = vld [vmem:[%s5 + $0x18] sm:$0xff]
    %v1039 = vld [vmem:[%s5 + $0x20] sm:$0xff]
    %v1040 = vld [vmem:[%s5 + $0x28] sm:$0xff]
    %v1041 = vld [vmem:[%s5 + $0x30] sm:$0xff]
    %v1042 = vld [vmem:[%s5 + $0x38] sm:$0xff]
    %v1043 = vld [vmem:[%s5 + $0x40] sm:$0xff]
    %v1044 = vld [vmem:[%s5 + $0x48] sm:$0xff]
    %v1045 = vld [vmem:[%s5 + $0x50] sm:$0xff]
    %v1046 = vld [vmem:[%s5 + $0x58] sm:$0xff]
    %v1047 = vld [vmem:[%s5 + $0x60] sm:$0xff]
    %v1048 = vld [vmem:[%s5 + $0x68] sm:$0xff]
    %v1049 = vld [vmem:[%s5 + $0x70] sm:$0xff]
    %v1050 = vld [vmem:[%s5 + $0x78] sm:$0xff]
    %v1051 = vld [vmem:[%s5 + $0x80] sm:$0xff]
    %v1052 = vld [vmem:[%s5 + $0x88] sm:$0xff]
    %v1053 = vld [vmem:[%s5 + $0x90] sm:$0xff]
    %v1054 = vld [vmem:[%s5 + $0x98] sm:$0xff]
    %v1055 = vld [vmem:[%s5 + $0xa0] sm:$0xff]
    %v1056 = vld [vmem:[%s5 + $0xa8] sm:$0xff]
    %v1057 = vld [vmem:[%s5 + $0xb0] sm:$0xff]
    %v1058 = vld [vmem:[%s5 + $0xb8] sm:$0xff]
    %v1059 = vld [vmem:[%s5 + $0xc0] sm:$0xff]
    %v1060 = vld [vmem:[%s5 + $0xc8] sm:$0xff]
    %v1061 = vld [vmem:[%s5 + $0xd0] sm:$0xff]
    %v1062 = vld [vmem:[%s5 + $0xd8] sm:$0xff]
    %v1063 = vld [vmem:[%s5 + $0xe0] sm:$0xff]
    %v1064 = vld [vmem:[%s5 + $0xe8] sm:$0xff]
    %v1065 = vld [vmem:[%s5 + $0xf0] sm:$0xff]
    %v1066 = vld [vmem:[%s5 + $0xf8] sm:$0xff]
    %v1067 = vld [vmem:[%s6] sm:$0x3]
    %v1069 = vperm.slane %v1067, 0
    %v1070 = vperm.slane %v1067, 1
    %v1105 = vunpack.c.l.b16 %v1035
    %v1106 = vunpack.c.h.b16 %v1035
    %v1107 = vunpack.c.l.b16 %v1036
    %v1108 = vunpack.c.h.b16 %v1036
    %v1109 = vunpack.c.l.b16 %v1037
    %v1110 = vunpack.c.h.b16 %v1037
    %v1111 = vunpack.c.l.b16 %v1038
    %v1112 = vunpack.c.h.b16 %v1038
    %v1113 = vunpack.c.l.b16 %v1039
    %v1114 = vunpack.c.h.b16 %v1039
    %v1115 = vunpack.c.l.b16 %v1040
    %v1116 = vunpack.c.h.b16 %v1040
    %v1117 = vunpack.c.l.b16 %v1041
    %v1118 = vunpack.c.h.b16 %v1041
    %v1119 = vunpack.c.l.b16 %v1042
    %v1120 = vunpack.c.h.b16 %v1042
    %v1121 = vunpack.c.l.b16 %v1043
    %v1122 = vunpack.c.h.b16 %v1043
    %v1123 = vunpack.c.l.b16 %v1044
    %v1124 = vunpack.c.h.b16 %v1044
    %v1125 = vunpack.c.l.b16 %v1045
    %v1126 = vunpack.c.h.b16 %v1045
    %v1127 = vunpack.c.l.b16 %v1046
    %v1128 = vunpack.c.h.b16 %v1046
    %v1129 = vunpack.c.l.b16 %v1047
    %v1130 = vunpack.c.h.b16 %v1047
    %v1131 = vunpack.c.l.b16 %v1048
    %v1132 = vunpack.c.h.b16 %v1048
    %v1133 = vunpack.c.l.b16 %v1049
    %v1134 = vunpack.c.h.b16 %v1049
    %v1135 = vunpack.c.l.b16 %v1050
    %v1136 = vunpack.c.h.b16 %v1050
    %v1137 = vunpack.c.l.b16 %v1051
    %v1138 = vunpack.c.h.b16 %v1051
    %v1139 = vunpack.c.l.b16 %v1052
    %v1140 = vunpack.c.h.b16 %v1052
    %v1141 = vunpack.c.l.b16 %v1053
    %v1142 = vunpack.c.h.b16 %v1053
    %v1143 = vunpack.c.l.b16 %v1054
    %v1144 = vunpack.c.h.b16 %v1054
    %v1145 = vunpack.c.l.b16 %v1055
    %v1146 = vunpack.c.h.b16 %v1055
    %v1147 = vunpack.c.l.b16 %v1056
    %v1148 = vunpack.c.h.b16 %v1056
    %v1149 = vunpack.c.l.b16 %v1057
    %v1150 = vunpack.c.h.b16 %v1057
    %v1151 = vunpack.c.l.b16 %v1058
    %v1152 = vunpack.c.h.b16 %v1058
    %v1153 = vunpack.c.l.b16 %v1059
    %v1154 = vunpack.c.h.b16 %v1059
    %v1155 = vunpack.c.l.b16 %v1060
    %v1156 = vunpack.c.h.b16 %v1060
    %v1157 = vunpack.c.l.b16 %v1061
    %v1158 = vunpack.c.h.b16 %v1061
    %v1159 = vunpack.c.l.b16 %v1062
    %v1160 = vunpack.c.h.b16 %v1062
    %v1161 = vunpack.c.l.b16 %v1063
    %v1162 = vunpack.c.h.b16 %v1063
    %v1163 = vunpack.c.l.b16 %v1064
    %v1164 = vunpack.c.h.b16 %v1064
    %v1165 = vunpack.c.l.b16 %v1065
    %v1166 = vunpack.c.h.b16 %v1065
    %v1167 = vunpack.c.l.b16 %v1066
    %v1168 = vunpack.c.h.b16 %v1066
    %v1169 = vpack.c.b16 %v1107, %v1105
    %v1170 = vpack.c.b16 %v1108, %v1106
    %v1171 = vpack.c.b16 %v1111, %v1109
    %v1172 = vpack.c.b16 %v1112, %v1110
    %v1173 = vpack.c.b16 %v1115, %v1113
    %v1174 = vpack.c.b16 %v1116, %v1114
    %v1175 = vpack.c.b16 %v1119, %v1117
    %v1176 = vpack.c.b16 %v1120, %v1118
    %v1177 = vpack.c.b16 %v1123, %v1121
    %v1178 = vpack.c.b16 %v1124, %v1122
    %v1179 = vpack.c.b16 %v1127, %v1125
    %v1180 = vpack.c.b16 %v1128, %v1126
    %v1181 = vpack.c.b16 %v1131, %v1129
    %v1182 = vpack.c.b16 %v1132, %v1130
    %v1183 = vpack.c.b16 %v1135, %v1133
    %v1184 = vpack.c.b16 %v1136, %v1134
    %v1185 = vpack.c.b16 %v1139, %v1137
    %v1186 = vpack.c.b16 %v1140, %v1138
    %v1187 = vpack.c.b16 %v1143, %v1141
    %v1188 = vpack.c.b16 %v1144, %v1142
    %v1189 = vpack.c.b16 %v1147, %v1145
    %v1190 = vpack.c.b16 %v1148, %v1146
    %v1191 = vpack.c.b16 %v1151, %v1149
    %v1192 = vpack.c.b16 %v1152, %v1150
    %v1193 = vpack.c.b16 %v1155, %v1153
    %v1194 = vpack.c.b16 %v1156, %v1154
    %v1195 = vpack.c.b16 %v1159, %v1157
    %v1196 = vpack.c.b16 %v1160, %v1158
    %v1197 = vpack.c.b16 %v1163, %v1161
    %v1198 = vpack.c.b16 %v1164, %v1162
    %v1199 = vpack.c.b16 %v1167, %v1165
    %v1200 = vpack.c.b16 %v1168, %v1166
    %1233 = vmatpush.bf16.msra.mxu0 %v1183
    %1234 = vmatpush.bf16.msra.mxu0 %v1181
    %1235 = vmatpush.bf16.msra.mxu0 %v1179
    %1236 = vmatpush.bf16.msra.mxu0 %v1177
    %1237 = vmatpush.bf16.msra.mxu0 %v1175
    %1238 = vmatpush.bf16.msra.mxu0 %v1173
    %1239 = vmatpush.bf16.msra.mxu0 %v1171
    %1240 = vmatpush.bf16.msra.mxu0 %v1169
    %1241 = vmatmul.bf16.gmra.mxu0 %v1003
    %v1242 = vpop.f32.mrf.mxu0
    %v1243 = vadd.f32 %v1069, %v1242
    %v1244 = vpop.f32.mrf.mxu0
    %v1245 = vadd.f32 %v1069, %v1244
    %1246 = vmatmul.bf16.gmra.mxu0 %v1005
    %v1247 = vpop.f32.mrf.mxu0
    %v1248 = vadd.f32 %v1069, %v1247
    %v1249 = vpop.f32.mrf.mxu0
    %v1250 = vadd.f32 %v1069, %v1249
    %1251 = vmatmul.bf16.gmra.mxu0 %v1007
    %v1252 = vpop.f32.mrf.mxu0
    %v1253 = vadd.f32 %v1069, %v1252
    %v1254 = vpop.f32.mrf.mxu0
    %v1255 = vadd.f32 %v1069, %v1254
    %1256 = vmatmul.bf16.gmra.mxu0 %v1009
    %v1257 = vpop.f32.mrf.mxu0
    %v1258 = vadd.f32 %v1069, %v1257
    %v1259 = vpop.f32.mrf.mxu0
    %v1260 = vadd.f32 %v1069, %v1259
    %1261 = vmatmul.bf16.gmra.mxu0 %v1011
    %v1262 = vpop.f32.mrf.mxu0
    %v1263 = vadd.f32 %v1069, %v1262
    %v1264 = vpop.f32.mrf.mxu0
    %v1265 = vadd.f32 %v1069, %v1264
    %1266 = vmatmul.bf16.gmra.mxu0 %v1013
    %v1267 = vpop.f32.mrf.mxu0
    %v1268 = vadd.f32 %v1069, %v1267
    %v1269 = vpop.f32.mrf.mxu0
    %v1270 = vadd.f32 %v1069, %v1269
    %1271 = vmatmul.bf16.gmra.mxu0 %v1015
    %v1272 = vpop.f32.mrf.mxu0
    %v1273 = vadd.f32 %v1069, %v1272
    %v1274 = vpop.f32.mrf.mxu0
    %v1275 = vadd.f32 %v1069, %v1274
    %1276 = vmatmul.bf16.gmra.mxu0 %v1017
    %v1277 = vpop.f32.mrf.mxu0
    %v1278 = vadd.f32 %v1069, %v1277
    %v1279 = vpop.f32.mrf.mxu0
    %v1280 = vadd.f32 %v1069, %v1279
    %1281 = vmatmul.bf16.gmra.mxu0 %v1019
    %v1282 = vpop.f32.mrf.mxu0
    %v1283 = vadd.f32 %v1069, %v1282
    %v1284 = vpop.f32.mrf.mxu0
    %v1285 = vadd.f32 %v1069, %v1284
    %1286 = vmatmul.bf16.gmra.mxu0 %v1021
    %v1287 = vpop.f32.mrf.mxu0
    %v1288 = vadd.f32 %v1069, %v1287
    %v1289 = vpop.f32.mrf.mxu0
    %v1290 = vadd.f32 %v1069, %v1289
    %1291 = vmatmul.bf16.gmra.mxu0 %v1023
    %v1292 = vpop.f32.mrf.mxu0
    %v1293 = vadd.f32 %v1069, %v1292
    %v1294 = vpop.f32.mrf.mxu0
    %v1295 = vadd.f32 %v1069, %v1294
    %1296 = vmatmul.bf16.gmra.mxu0 %v1025
    %v1297 = vpop.f32.mrf.mxu0
    %v1298 = vadd.f32 %v1069, %v1297
    %v1299 = vpop.f32.mrf.mxu0
    %v1300 = vadd.f32 %v1069, %v1299
    %1301 = vmatmul.bf16.gmra.mxu0 %v1027
    %v1302 = vpop.f32.mrf.mxu0
    %v1303 = vadd.f32 %v1069, %v1302
    %v1304 = vpop.f32.mrf.mxu0
    %v1305 = vadd.f32 %v1069, %v1304
    %1306 = vmatmul.bf16.gmra.mxu0 %v1029
    %v1307 = vpop.f32.mrf.mxu0
    %v1308 = vadd.f32 %v1069, %v1307
    %v1309 = vpop.f32.mrf.mxu0
    %v1310 = vadd.f32 %v1069, %v1309
    %1311 = vmatmul.bf16.gmra.mxu0 %v1031
    %v1312 = vpop.f32.mrf.mxu0
    %v1313 = vadd.f32 %v1069, %v1312
    %v1314 = vpop.f32.mrf.mxu0
    %v1315 = vadd.f32 %v1069, %v1314
    %1316 = vmatmul.bf16.gmra.mxu0 %v1033
    %v1317 = vpop.f32.mrf.mxu0
    %v1318 = vadd.f32 %v1069, %v1317
    %v1319 = vpop.f32.mrf.mxu0
    %v1320 = vadd.f32 %v1069, %v1319
    %1321 = vdwg.mxu0
    %1322 = vmatpush.bf16.msra.mxu0 %v1199
    %1323 = vmatpush.bf16.msra.mxu0 %v1197
    %1324 = vmatpush.bf16.msra.mxu0 %v1195
    %1325 = vmatpush.bf16.msra.mxu0 %v1193
    %1326 = vmatpush.bf16.msra.mxu0 %v1191
    %1327 = vmatpush.bf16.msra.mxu0 %v1189
    %1328 = vmatpush.bf16.msra.mxu0 %v1187
    %1329 = vmatpush.bf16.msra.mxu0 %v1185
    %1330 = vmatmul.bf16.gmra.mxu0 %v1004
    %v1331 = vpop.f32.mrf.mxu0
    %v1332 = vadd.f32 %v1243, %v1331
    %v1333 = vpop.f32.mrf.mxu0
    %v1334 = vadd.f32 %v1245, %v1333
    %1335 = vmatmul.bf16.gmra.mxu0 %v1006
    %v1336 = vpop.f32.mrf.mxu0
    %v1337 = vadd.f32 %v1248, %v1336
    %v1338 = vpop.f32.mrf.mxu0
    %v1339 = vadd.f32 %v1250, %v1338
    %1340 = vmatmul.bf16.gmra.mxu0 %v1008
    %v1341 = vpop.f32.mrf.mxu0
    %v1342 = vadd.f32 %v1253, %v1341
    %v1343 = vpop.f32.mrf.mxu0
    %v1344 = vadd.f32 %v1255, %v1343
    %1345 = vmatmul.bf16.gmra.mxu0 %v1010
    %v1346 = vpop.f32.mrf.mxu0
    %v1347 = vadd.f32 %v1258, %v1346
    %v1348 = vpop.f32.mrf.mxu0
    %v1349 = vadd.f32 %v1260, %v1348
    %1350 = vmatmul.bf16.gmra.mxu0 %v1012
    %v1351 = vpop.f32.mrf.mxu0
    %v1352 = vadd.f32 %v1263, %v1351
    %v1353 = vpop.f32.mrf.mxu0
    %v1354 = vadd.f32 %v1265, %v1353
    %1355 = vmatmul.bf16.gmra.mxu0 %v1014
    %v1356 = vpop.f32.mrf.mxu0
    %v1357 = vadd.f32 %v1268, %v1356
    %v1358 = vpop.f32.mrf.mxu0
    %v1359 = vadd.f32 %v1270, %v1358
    %1360 = vmatmul.bf16.gmra.mxu0 %v1016
    %v1361 = vpop.f32.mrf.mxu0
    %v1362 = vadd.f32 %v1273, %v1361
    %v1363 = vpop.f32.mrf.mxu0
    %v1364 = vadd.f32 %v1275, %v1363
    %1365 = vmatmul.bf16.gmra.mxu0 %v1018
    %v1366 = vpop.f32.mrf.mxu0
    %v1367 = vadd.f32 %v1278, %v1366
    %v1368 = vpop.f32.mrf.mxu0
    %v1369 = vadd.f32 %v1280, %v1368
    %1370 = vmatmul.bf16.gmra.mxu0 %v1020
    %v1371 = vpop.f32.mrf.mxu0
    %v1372 = vadd.f32 %v1283, %v1371
    %v1373 = vpop.f32.mrf.mxu0
    %v1374 = vadd.f32 %v1285, %v1373
    %1375 = vmatmul.bf16.gmra.mxu0 %v1022
    %v1376 = vpop.f32.mrf.mxu0
    %v1377 = vadd.f32 %v1288, %v1376
    %v1378 = vpop.f32.mrf.mxu0
    %v1379 = vadd.f32 %v1290, %v1378
    %1380 = vmatmul.bf16.gmra.mxu0 %v1024
    %v1381 = vpop.f32.mrf.mxu0
    %v1382 = vadd.f32 %v1293, %v1381
    %v1383 = vpop.f32.mrf.mxu0
    %v1384 = vadd.f32 %v1295, %v1383
    %1385 = vmatmul.bf16.gmra.mxu0 %v1026
    %v1386 = vpop.f32.mrf.mxu0
    %v1387 = vadd.f32 %v1298, %v1386
    %v1388 = vpop.f32.mrf.mxu0
    %v1389 = vadd.f32 %v1300, %v1388
    %1390 = vmatmul.bf16.gmra.mxu0 %v1028
    %v1391 = vpop.f32.mrf.mxu0
    %v1392 = vadd.f32 %v1303, %v1391
    %v1393 = vpop.f32.mrf.mxu0
    %v1394 = vadd.f32 %v1305, %v1393
    %1395 = vmatmul.bf16.gmra.mxu0 %v1030
    %v1396 = vpop.f32.mrf.mxu0
    %v1397 = vadd.f32 %v1308, %v1396
    %v1398 = vpop.f32.mrf.mxu0
    %v1399 = vadd.f32 %v1310, %v1398
    %1400 = vmatmul.bf16.gmra.mxu0 %v1032
    %v1401 = vpop.f32.mrf.mxu0
    %v1402 = vadd.f32 %v1313, %v1401
    %v1403 = vpop.f32.mrf.mxu0
    %v1404 = vadd.f32 %v1315, %v1403
    %1405 = vmatmul.bf16.gmra.mxu0 %v1034
    %v1406 = vpop.f32.mrf.mxu0
    %v1407 = vadd.f32 %v1318, %v1406
    %v1408 = vpop.f32.mrf.mxu0
    %v1409 = vadd.f32 %v1320, %v1408
    %1410 = vdwg.mxu0
    %1411 = vmatpush.bf16.msra.mxu0 %v1184
    %1412 = vmatpush.bf16.msra.mxu0 %v1182
    %1413 = vmatpush.bf16.msra.mxu0 %v1180
    %1414 = vmatpush.bf16.msra.mxu0 %v1178
    %1415 = vmatpush.bf16.msra.mxu0 %v1176
    %1416 = vmatpush.bf16.msra.mxu0 %v1174
    %1417 = vmatpush.bf16.msra.mxu0 %v1172
    %1418 = vmatpush.bf16.msra.mxu0 %v1170
    %1419 = vmatmul.bf16.gmra.mxu0 %v1003
    %v1420 = vpop.f32.mrf.mxu0
    %v1421 = vadd.f32 %v1070, %v1420
    %v1422 = vpop.f32.mrf.mxu0
    %v1423 = vadd.f32 %v1070, %v1422
    %1424 = vmatmul.bf16.gmra.mxu0 %v1005
    %v1425 = vpop.f32.mrf.mxu0
    %v1426 = vadd.f32 %v1070, %v1425
    %v1427 = vpop.f32.mrf.mxu0
    %v1428 = vadd.f32 %v1070, %v1427
    %1429 = vmatmul.bf16.gmra.mxu0 %v1007
    %v1430 = vpop.f32.mrf.mxu0
    %v1431 = vadd.f32 %v1070, %v1430
    %v1432 = vpop.f32.mrf.mxu0
    %v1433 = vadd.f32 %v1070, %v1432
    %1434 = vmatmul.bf16.gmra.mxu0 %v1009
    %v1435 = vpop.f32.mrf.mxu0
    %v1436 = vadd.f32 %v1070, %v1435
    %v1437 = vpop.f32.mrf.mxu0
    %v1438 = vadd.f32 %v1070, %v1437
    %1439 = vmatmul.bf16.gmra.mxu0 %v1011
    %v1440 = vpop.f32.mrf.mxu0
    %v1441 = vadd.f32 %v1070, %v1440
    %v1442 = vpop.f32.mrf.mxu0
    %v1443 = vadd.f32 %v1070, %v1442
    %1444 = vmatmul.bf16.gmra.mxu0 %v1013
    %v1445 = vpop.f32.mrf.mxu0
    %v1446 = vadd.f32 %v1070, %v1445
    %v1447 = vpop.f32.mrf.mxu0
    %v1448 = vadd.f32 %v1070, %v1447
    %1449 = vmatmul.bf16.gmra.mxu0 %v1015
    %v1450 = vpop.f32.mrf.mxu0
    %v1451 = vadd.f32 %v1070, %v1450
    %v1452 = vpop.f32.mrf.mxu0
    %v1453 = vadd.f32 %v1070, %v1452
    %1454 = vmatmul.bf16.gmra.mxu0 %v1017
    %v1455 = vpop.f32.mrf.mxu0
    %v1456 = vadd.f32 %v1070, %v1455
    %v1457 = vpop.f32.mrf.mxu0
    %v1458 = vadd.f32 %v1070, %v1457
    %1459 = vmatmul.bf16.gmra.mxu0 %v1019
    %v1460 = vpop.f32.mrf.mxu0
    %v1461 = vadd.f32 %v1070, %v1460
    %v1462 = vpop.f32.mrf.mxu0
    %v1463 = vadd.f32 %v1070, %v1462
    %1464 = vmatmul.bf16.gmra.mxu0 %v1021
    %v1465 = vpop.f32.mrf.mxu0
    %v1466 = vadd.f32 %v1070, %v1465
    %v1467 = vpop.f32.mrf.mxu0
    %v1468 = vadd.f32 %v1070, %v1467
    %1469 = vmatmul.bf16.gmra.mxu0 %v1023
    %v1470 = vpop.f32.mrf.mxu0
    %v1471 = vadd.f32 %v1070, %v1470
    %v1472 = vpop.f32.mrf.mxu0
    %v1473 = vadd.f32 %v1070, %v1472
    %1474 = vmatmul.bf16.gmra.mxu0 %v1025
    %v1475 = vpop.f32.mrf.mxu0
    %v1476 = vadd.f32 %v1070, %v1475
    %v1477 = vpop.f32.mrf.mxu0
    %v1478 = vadd.f32 %v1070, %v1477
    %1479 = vmatmul.bf16.gmra.mxu0 %v1027
    %v1480 = vpop.f32.mrf.mxu0
    %v1481 = vadd.f32 %v1070, %v1480
    %v1482 = vpop.f32.mrf.mxu0
    %v1483 = vadd.f32 %v1070, %v1482
    %1484 = vmatmul.bf16.gmra.mxu0 %v1029
    %v1485 = vpop.f32.mrf.mxu0
    %v1486 = vadd.f32 %v1070, %v1485
    %v1487 = vpop.f32.mrf.mxu0
    %v1488 = vadd.f32 %v1070, %v1487
    %1489 = vmatmul.bf16.gmra.mxu0 %v1031
    %v1490 = vpop.f32.mrf.mxu0
    %v1491 = vadd.f32 %v1070, %v1490
    %v1492 = vpop.f32.mrf.mxu0
    %v1493 = vadd.f32 %v1070, %v1492
    %1494 = vmatmul.bf16.gmra.mxu0 %v1033
    %v1495 = vpop.f32.mrf.mxu0
    %v1496 = vadd.f32 %v1070, %v1495
    %v1497 = vpop.f32.mrf.mxu0
    %v1498 = vadd.f32 %v1070, %v1497
    %1499 = vdwg.mxu0
    %1500 = vmatpush.bf16.msra.mxu0 %v1200
    %1501 = vmatpush.bf16.msra.mxu0 %v1198
    %1502 = vmatpush.bf16.msra.mxu0 %v1196
    %1503 = vmatpush.bf16.msra.mxu0 %v1194
    %1504 = vmatpush.bf16.msra.mxu0 %v1192
    %1505 = vmatpush.bf16.msra.mxu0 %v1190
    %1506 = vmatpush.bf16.msra.mxu0 %v1188
    %1507 = vmatpush.bf16.msra.mxu0 %v1186
    %1508 = vmatmul.bf16.gmra.mxu0 %v1004
    %v1509 = vpop.f32.mrf.mxu0
    %v1510 = vadd.f32 %v1421, %v1509
    %v1511 = vpop.f32.mrf.mxu0
    %v1512 = vadd.f32 %v1423, %v1511
    %1513 = vmatmul.bf16.gmra.mxu0 %v1006
    %v1514 = vpop.f32.mrf.mxu0
    %v1515 = vadd.f32 %v1426, %v1514
    %v1516 = vpop.f32.mrf.mxu0
    %v1517 = vadd.f32 %v1428, %v1516
    %1518 = vmatmul.bf16.gmra.mxu0 %v1008
    %v1519 = vpop.f32.mrf.mxu0
    %v1520 = vadd.f32 %v1431, %v1519
    %v1521 = vpop.f32.mrf.mxu0
    %v1522 = vadd.f32 %v1433, %v1521
    %1523 = vmatmul.bf16.gmra.mxu0 %v1010
    %v1524 = vpop.f32.mrf.mxu0
    %v1525 = vadd.f32 %v1436, %v1524
    %v1526 = vpop.f32.mrf.mxu0
    %v1527 = vadd.f32 %v1438, %v1526
    %1528 = vmatmul.bf16.gmra.mxu0 %v1012
    %v1529 = vpop.f32.mrf.mxu0
    %v1530 = vadd.f32 %v1441, %v1529
    %v1531 = vpop.f32.mrf.mxu0
    %v1532 = vadd.f32 %v1443, %v1531
    %1533 = vmatmul.bf16.gmra.mxu0 %v1014
    %v1534 = vpop.f32.mrf.mxu0
    %v1535 = vadd.f32 %v1446, %v1534
    %v1536 = vpop.f32.mrf.mxu0
    %v1537 = vadd.f32 %v1448, %v1536
    %1538 = vmatmul.bf16.gmra.mxu0 %v1016
    %v1539 = vpop.f32.mrf.mxu0
    %v1540 = vadd.f32 %v1451, %v1539
    %v1541 = vpop.f32.mrf.mxu0
    %v1542 = vadd.f32 %v1453, %v1541
    %1543 = vmatmul.bf16.gmra.mxu0 %v1018
    %v1544 = vpop.f32.mrf.mxu0
    %v1545 = vadd.f32 %v1456, %v1544
    %v1546 = vpop.f32.mrf.mxu0
    %v1547 = vadd.f32 %v1458, %v1546
    %1548 = vmatmul.bf16.gmra.mxu0 %v1020
    %v1549 = vpop.f32.mrf.mxu0
    %v1550 = vadd.f32 %v1461, %v1549
    %v1551 = vpop.f32.mrf.mxu0
    %v1552 = vadd.f32 %v1463, %v1551
    %1553 = vmatmul.bf16.gmra.mxu0 %v1022
    %v1554 = vpop.f32.mrf.mxu0
    %v1555 = vadd.f32 %v1466, %v1554
    %v1556 = vpop.f32.mrf.mxu0
    %v1557 = vadd.f32 %v1468, %v1556
    %1558 = vmatmul.bf16.gmra.mxu0 %v1024
    %v1559 = vpop.f32.mrf.mxu0
    %v1560 = vadd.f32 %v1471, %v1559
    %v1561 = vpop.f32.mrf.mxu0
    %v1562 = vadd.f32 %v1473, %v1561
    %1563 = vmatmul.bf16.gmra.mxu0 %v1026
    %v1564 = vpop.f32.mrf.mxu0
    %v1565 = vadd.f32 %v1476, %v1564
    %v1566 = vpop.f32.mrf.mxu0
    %v1567 = vadd.f32 %v1478, %v1566
    %1568 = vmatmul.bf16.gmra.mxu0 %v1028
    %v1569 = vpop.f32.mrf.mxu0
    %v1570 = vadd.f32 %v1481, %v1569
    %v1571 = vpop.f32.mrf.mxu0
    %v1572 = vadd.f32 %v1483, %v1571
    %1573 = vmatmul.bf16.gmra.mxu0 %v1030
    %v1574 = vpop.f32.mrf.mxu0
    %v1575 = vadd.f32 %v1486, %v1574
    %v1576 = vpop.f32.mrf.mxu0
    %v1577 = vadd.f32 %v1488, %v1576
    %1578 = vmatmul.bf16.gmra.mxu0 %v1032
    %v1579 = vpop.f32.mrf.mxu0
    %v1580 = vadd.f32 %v1491, %v1579
    %v1581 = vpop.f32.mrf.mxu0
    %v1582 = vadd.f32 %v1493, %v1581
    %1583 = vmatmul.bf16.gmra.mxu0 %v1034
    %v1584 = vpop.f32.mrf.mxu0
    %v1585 = vadd.f32 %v1496, %v1584
    %v1586 = vpop.f32.mrf.mxu0
    %v1587 = vadd.f32 %v1498, %v1586
    %1588 = vdwg.mxu0
    %v1589 = vmax.f32 %v1332, 0.0
    %v1590 = vmax.f32 %v1510, 0.0
    %v1591 = vmax.f32 %v1334, 0.0
    %v1592 = vmax.f32 %v1512, 0.0
    %v1593 = vmax.f32 %v1337, 0.0
    %v1594 = vmax.f32 %v1515, 0.0
    %v1595 = vmax.f32 %v1339, 0.0
    %v1596 = vmax.f32 %v1517, 0.0
    %v1597 = vmax.f32 %v1342, 0.0
    %v1598 = vmax.f32 %v1520, 0.0
    %v1599 = vmax.f32 %v1344, 0.0
    %v1600 = vmax.f32 %v1522, 0.0
    %v1601 = vmax.f32 %v1347, 0.0
    %v1602 = vmax.f32 %v1525, 0.0
    %v1603 = vmax.f32 %v1349, 0.0
    %v1604 = vmax.f32 %v1527, 0.0
    %v1605 = vmax.f32 %v1352, 0.0
    %v1606 = vmax.f32 %v1530, 0.0
    %v1607 = vmax.f32 %v1354, 0.0
    %v1608 = vmax.f32 %v1532, 0.0
    %v1609 = vmax.f32 %v1357, 0.0
    %v1610 = vmax.f32 %v1535, 0.0
    %v1611 = vmax.f32 %v1359, 0.0
    %v1612 = vmax.f32 %v1537, 0.0
    %v1613 = vmax.f32 %v1362, 0.0
    %v1614 = vmax.f32 %v1540, 0.0
    %v1615 = vmax.f32 %v1364, 0.0
    %v1616 = vmax.f32 %v1542, 0.0
    %v1617 = vmax.f32 %v1367, 0.0
    %v1618 = vmax.f32 %v1545, 0.0
    %v1619 = vmax.f32 %v1369, 0.0
    %v1620 = vmax.f32 %v1547, 0.0
    %v1621 = vmax.f32 %v1372, 0.0
    %v1622 = vmax.f32 %v1550, 0.0
    %v1623 = vmax.f32 %v1374, 0.0
    %v1624 = vmax.f32 %v1552, 0.0
    %v1625 = vmax.f32 %v1377, 0.0
    %v1626 = vmax.f32 %v1555, 0.0
    %v1627 = vmax.f32 %v1379, 0.0
    %v1628 = vmax.f32 %v1557, 0.0
    %v1629 = vmax.f32 %v1382, 0.0
    %v1630 = vmax.f32 %v1560, 0.0
    %v1631 = vmax.f32 %v1384, 0.0
    %v1632 = vmax.f32 %v1562, 0.0
    %v1633 = vmax.f32 %v1387, 0.0
    %v1634 = vmax.f32 %v1565, 0.0
    %v1635 = vmax.f32 %v1389, 0.0
    %v1636 = vmax.f32 %v1567, 0.0
    %v1637 = vmax.f32 %v1392, 0.0
    %v1638 = vmax.f32 %v1570, 0.0
    %v1639 = vmax.f32 %v1394, 0.0
    %v1640 = vmax.f32 %v1572, 0.0
    %v1641 = vmax.f32 %v1397, 0.0
    %v1642 = vmax.f32 %v1575, 0.0
    %v1643 = vmax.f32 %v1399, 0.0
    %v1644 = vmax.f32 %v1577, 0.0
    %v1645 = vmax.f32 %v1402, 0.0
    %v1646 = vmax.f32 %v1580, 0.0
    %v1647 = vmax.f32 %v1404, 0.0
    %v1648 = vmax.f32 %v1582, 0.0
    %v1649 = vmax.f32 %v1407, 0.0
    %v1650 = vmax.f32 %v1585, 0.0
    %v1651 = vmax.f32 %v1409, 0.0
    %v1652 = vmax.f32 %v1587, 0.0
    %v1653 = vld [vmem:[%s7] sm:$0x3]
    %v1655 = vperm.slane %v1653, 0
    %v1656 = vperm.slane %v1653, 1
    %v1659 = vmul.f32 %v1589, %v1655
    %v1660 = vmul.f32 %v1590, %v1656
    %v1661 = vmul.f32 %v1591, %v1655
    %v1662 = vmul.f32 %v1592, %v1656
    %v1663 = vmul.f32 %v1593, %v1655
    %v1664 = vmul.f32 %v1594, %v1656
    %v1665 = vmul.f32 %v1595, %v1655
    %v1666 = vmul.f32 %v1596, %v1656
    %v1667 = vmul.f32 %v1597, %v1655
    %v1668 = vmul.f32 %v1598, %v1656
    %v1669 = vmul.f32 %v1599, %v1655
    %v1670 = vmul.f32 %v1600, %v1656
    %v1671 = vmul.f32 %v1601, %v1655
    %v1672 = vmul.f32 %v1602, %v1656
    %v1673 = vmul.f32 %v1603, %v1655
    %v1674 = vmul.f32 %v1604, %v1656
    %v1675 = vmul.f32 %v1605, %v1655
    %v1676 = vmul.f32 %v1606, %v1656
    %v1677 = vmul.f32 %v1607, %v1655
    %v1678 = vmul.f32 %v1608, %v1656
    %v1679 = vmul.f32 %v1609, %v1655
    %v1680 = vmul.f32 %v1610, %v1656
    %v1681 = vmul.f32 %v1611, %v1655
    %v1682 = vmul.f32 %v1612, %v1656
    %v1683 = vmul.f32 %v1613, %v1655
    %v1684 = vmul.f32 %v1614, %v1656
    %v1685 = vmul.f32 %v1615, %v1655
    %v1686 = vmul.f32 %v1616, %v1656
    %v1687 = vmul.f32 %v1617, %v1655
    %v1688 = vmul.f32 %v1618, %v1656
    %v1689 = vmul.f32 %v1619, %v1655
    %v1690 = vmul.f32 %v1620, %v1656
    %v1691 = vmul.f32 %v1621, %v1655
    %v1692 = vmul.f32 %v1622, %v1656
    %v1693 = vmul.f32 %v1623, %v1655
    %v1694 = vmul.f32 %v1624, %v1656
    %v1695 = vmul.f32 %v1625, %v1655
    %v1696 = vmul.f32 %v1626, %v1656
    %v1697 = vmul.f32 %v1627, %v1655
    %v1698 = vmul.f32 %v1628, %v1656
    %v1699 = vmul.f32 %v1629, %v1655
    %v1700 = vmul.f32 %v1630, %v1656
    %v1701 = vmul.f32 %v1631, %v1655
    %v1702 = vmul.f32 %v1632, %v1656
    %v1703 = vmul.f32 %v1633, %v1655
    %v1704 = vmul.f32 %v1634, %v1656
    %v1705 = vmul.f32 %v1635, %v1655
    %v1706 = vmul.f32 %v1636, %v1656
    %v1707 = vmul.f32 %v1637, %v1655
    %v1708 = vmul.f32 %v1638, %v1656
    %v1709 = vmul.f32 %v1639, %v1655
    %v1710 = vmul.f32 %v1640, %v1656
    %v1711 = vmul.f32 %v1641, %v1655
    %v1712 = vmul.f32 %v1642, %v1656
    %v1713 = vmul.f32 %v1643, %v1655
    %v1714 = vmul.f32 %v1644, %v1656
    %v1715 = vmul.f32 %v1645, %v1655
    %v1716 = vmul.f32 %v1646, %v1656
    %v1717 = vmul.f32 %v1647, %v1655
    %v1718 = vmul.f32 %v1648, %v1656
    %v1719 = vmul.f32 %v1649, %v1655
    %v1720 = vmul.f32 %v1650, %v1656
    %v1721 = vmul.f32 %v1651, %v1655
    %v1722 = vmul.f32 %v1652, %v1656
    %v1723 = vadd.f32 %v1659, %v1660
    %1724 = vadd.xlane.f32.xlu0 %v1723
    %v1725 = vpop.xlane.xlu0 %1724
    %v1726 = vadd.f32 %v1661, %v1662
    %1727 = vadd.xlane.f32.xlu0 %v1726
    %v1728 = vpop.xlane.xlu0 %1727
    %v1729 = vadd.f32 %v1663, %v1664
    %1730 = vadd.xlane.f32.xlu0 %v1729
    %v1731 = vpop.xlane.xlu0 %1730
    %v1732 = vadd.f32 %v1665, %v1666
    %1733 = vadd.xlane.f32.xlu0 %v1732
    %v1734 = vpop.xlane.xlu0 %1733
    %v1735 = vadd.f32 %v1667, %v1668
    %1736 = vadd.xlane.f32.xlu0 %v1735
    %v1737 = vpop.xlane.xlu0 %1736
    %v1738 = vadd.f32 %v1669, %v1670
    %1739 = vadd.xlane.f32.xlu0 %v1738
    %v1740 = vpop.xlane.xlu0 %1739
    %v1741 = vadd.f32 %v1671, %v1672
    %1742 = vadd.xlane.f32.xlu0 %v1741
    %v1743 = vpop.xlane.xlu0 %1742
    %v1744 = vadd.f32 %v1673, %v1674
    %1745 = vadd.xlane.f32.xlu0 %v1744
    %v1746 = vpop.xlane.xlu0 %1745
    %v1747 = vadd.f32 %v1675, %v1676
    %1748 = vadd.xlane.f32.xlu0 %v1747
    %v1749 = vpop.xlane.xlu0 %1748
    %v1750 = vadd.f32 %v1677, %v1678
    %1751 = vadd.xlane.f32.xlu0 %v1750
    %v1752 = vpop.xlane.xlu0 %1751
    %v1753 = vadd.f32 %v1679, %v1680
    %1754 = vadd.xlane.f32.xlu0 %v1753
    %v1755 = vpop.xlane.xlu0 %1754
    %v1756 = vadd.f32 %v1681, %v1682
    %1757 = vadd.xlane.f32.xlu0 %v1756
    %v1758 = vpop.xlane.xlu0 %1757
    %v1759 = vadd.f32 %v1683, %v1684
    %1760 = vadd.xlane.f32.xlu0 %v1759
    %v1761 = vpop.xlane.xlu0 %1760
    %v1762 = vadd.f32 %v1685, %v1686
    %1763 = vadd.xlane.f32.xlu0 %v1762
    %v1764 = vpop.xlane.xlu0 %1763
    %v1765 = vadd.f32 %v1687, %v1688
    %1766 = vadd.xlane.f32.xlu0 %v1765
    %v1767 = vpop.xlane.xlu0 %1766
    %v1768 = vadd.f32 %v1689, %v1690
    %1769 = vadd.xlane.f32.xlu0 %v1768
    %v1770 = vpop.xlane.xlu0 %1769
    %v1771 = vadd.f32 %v1691, %v1692
    %1772 = vadd.xlane.f32.xlu0 %v1771
    %v1773 = vpop.xlane.xlu0 %1772
    %v1774 = vadd.f32 %v1693, %v1694
    %1775 = vadd.xlane.f32.xlu0 %v1774
    %v1776 = vpop.xlane.xlu0 %1775
    %v1777 = vadd.f32 %v1695, %v1696
    %1778 = vadd.xlane.f32.xlu0 %v1777
    %v1779 = vpop.xlane.xlu0 %1778
    %v1780 = vadd.f32 %v1697, %v1698
    %1781 = vadd.xlane.f32.xlu0 %v1780
    %v1782 = vpop.xlane.xlu0 %1781
    %v1783 = vadd.f32 %v1699, %v1700
    %1784 = vadd.xlane.f32.xlu0 %v1783
    %v1785 = vpop.xlane.xlu0 %1784
    %v1786 = vadd.f32 %v1701, %v1702
    %1787 = vadd.xlane.f32.xlu0 %v1786
    %v1788 = vpop.xlane.xlu0 %1787
    %v1789 = vadd.f32 %v1703, %v1704
    %1790 = vadd.xlane.f32.xlu0 %v1789
    %v1791 = vpop.xlane.xlu0 %1790
    %v1792 = vadd.f32 %v1705, %v1706
    %1793 = vadd.xlane.f32.xlu0 %v1792
    %v1794 = vpop.xlane.xlu0 %1793
    %v1795 = vadd.f32 %v1707, %v1708
    %1796 = vadd.xlane.f32.xlu0 %v1795
    %v1797 = vpop.xlane.xlu0 %1796
    %v1798 = vadd.f32 %v1709, %v1710
    %1799 = vadd.xlane.f32.xlu0 %v1798
    %v1800 = vpop.xlane.xlu0 %1799
    %v1801 = vadd.f32 %v1711, %v1712
    %1802 = vadd.xlane.f32.xlu0 %v1801
    %v1803 = vpop.xlane.xlu0 %1802
    %v1804 = vadd.f32 %v1713, %v1714
    %1805 = vadd.xlane.f32.xlu0 %v1804
    %v1806 = vpop.xlane.xlu0 %1805
    %v1807 = vadd.f32 %v1715, %v1716
    %1808 = vadd.xlane.f32.xlu0 %v1807
    %v1809 = vpop.xlane.xlu0 %1808
    %v1810 = vadd.f32 %v1717, %v1718
    %1811 = vadd.xlane.f32.xlu0 %v1810
    %v1812 = vpop.xlane.xlu0 %1811
    %v1813 = vadd.f32 %v1719, %v1720
    %1814 = vadd.xlane.f32.xlu0 %v1813
    %v1815 = vpop.xlane.xlu0 %1814
    %v1816 = vadd.f32 %v1721, %v1722
    %1817 = vadd.xlane.f32.xlu0 %v1816
    %v1818 = vpop.xlane.xlu0 %1817
    %v1819 = vld [vmem:[#allocation2] sm:$0x1]
    %1821 = vset.pattern.permute.xlu0 0
    %1822 = vperm.xlu0 %1821, %v1819
    %v1823 = vpop.permute.xlu0 %1822
    %v1825 = vperm.slane %v1823, 0
    %v1826 = vadd.f32 %v1725, %v1825
    %v1827 = vadd.f32 %v1728, %v1825
    %v1828 = vadd.f32 %v1731, %v1825
    %v1829 = vadd.f32 %v1734, %v1825
    %v1830 = vadd.f32 %v1737, %v1825
    %v1831 = vadd.f32 %v1740, %v1825
    %v1832 = vadd.f32 %v1743, %v1825
    %v1833 = vadd.f32 %v1746, %v1825
    %v1834 = vadd.f32 %v1749, %v1825
    %v1835 = vadd.f32 %v1752, %v1825
    %v1836 = vadd.f32 %v1755, %v1825
    %v1837 = vadd.f32 %v1758, %v1825
    %v1838 = vadd.f32 %v1761, %v1825
    %v1839 = vadd.f32 %v1764, %v1825
    %v1840 = vadd.f32 %v1767, %v1825
    %v1841 = vadd.f32 %v1770, %v1825
    %v1842 = vadd.f32 %v1773, %v1825
    %v1843 = vadd.f32 %v1776, %v1825
    %v1844 = vadd.f32 %v1779, %v1825
    %v1845 = vadd.f32 %v1782, %v1825
    %v1846 = vadd.f32 %v1785, %v1825
    %v1847 = vadd.f32 %v1788, %v1825
    %v1848 = vadd.f32 %v1791, %v1825
    %v1849 = vadd.f32 %v1794, %v1825
    %v1850 = vadd.f32 %v1797, %v1825
    %v1851 = vadd.f32 %v1800, %v1825
    %v1852 = vadd.f32 %v1803, %v1825
    %v1853 = vadd.f32 %v1806, %v1825
    %v1854 = vadd.f32 %v1809, %v1825
    %v1855 = vadd.f32 %v1812, %v1825
    %v1856 = vadd.f32 %v1815, %v1825
    %v1857 = vadd.f32 %v1818, %v1825
    %v1890 = vperm.slane %v1826, 0
    %v1891 = vperm.slane %v1826, 1
    %v1892 = vperm.slane %v1826, 2
    %v1893 = vperm.slane %v1826, 3
    %v1894 = vperm.slane %v1826, 4
    %v1895 = vperm.slane %v1826, 5
    %v1896 = vperm.slane %v1826, 6
    %v1897 = vperm.slane %v1826, 7
    %v1898 = vperm.slane %v1827, 0
    %v1899 = vperm.slane %v1827, 1
    %v1900 = vperm.slane %v1827, 2
    %v1901 = vperm.slane %v1827, 3
    %v1902 = vperm.slane %v1827, 4
    %v1903 = vperm.slane %v1827, 5
    %v1904 = vperm.slane %v1827, 6
    %v1905 = vperm.slane %v1827, 7
    %v1906 = vperm.slane %v1828, 0
    %v1907 = vperm.slane %v1828, 1
    %v1908 = vperm.slane %v1828, 2
    %v1909 = vperm.slane %v1828, 3
    %v1910 = vperm.slane %v1828, 4
    %v1911 = vperm.slane %v1828, 5
    %v1912 = vperm.slane %v1828, 6
    %v1913 = vperm.slane %v1828, 7
    %v1914 = vperm.slane %v1829, 0
    %v1915 = vperm.slane %v1829, 1
    %v1916 = vperm.slane %v1829, 2
    %v1917 = vperm.slane %v1829, 3
    %v1918 = vperm.slane %v1829, 4
    %v1919 = vperm.slane %v1829, 5
    %v1920 = vperm.slane %v1829, 6
    %v1921 = vperm.slane %v1829, 7
    %v1922 = vperm.slane %v1830, 0
    %v1923 = vperm.slane %v1830, 1
    %v1924 = vperm.slane %v1830, 2
    %v1925 = vperm.slane %v1830, 3
    %v1926 = vperm.slane %v1830, 4
    %v1927 = vperm.slane %v1830, 5
    %v1928 = vperm.slane %v1830, 6
    %v1929 = vperm.slane %v1830, 7
    %v1930 = vperm.slane %v1831, 0
    %v1931 = vperm.slane %v1831, 1
    %v1932 = vperm.slane %v1831, 2
    %v1933 = vperm.slane %v1831, 3
    %v1934 = vperm.slane %v1831, 4
    %v1935 = vperm.slane %v1831, 5
    %v1936 = vperm.slane %v1831, 6
    %v1937 = vperm.slane %v1831, 7
    %v1938 = vperm.slane %v1832, 0
    %v1939 = vperm.slane %v1832, 1
    %v1940 = vperm.slane %v1832, 2
    %v1941 = vperm.slane %v1832, 3
    %v1942 = vperm.slane %v1832, 4
    %v1943 = vperm.slane %v1832, 5
    %v1944 = vperm.slane %v1832, 6
    %v1945 = vperm.slane %v1832, 7
    %v1946 = vperm.slane %v1833, 0
    %v1947 = vperm.slane %v1833, 1
    %v1948 = vperm.slane %v1833, 2
    %v1949 = vperm.slane %v1833, 3
    %v1950 = vperm.slane %v1833, 4
    %v1951 = vperm.slane %v1833, 5
    %v1952 = vperm.slane %v1833, 6
    %v1953 = vperm.slane %v1833, 7
    %v1954 = vperm.slane %v1834, 0
    %v1955 = vperm.slane %v1834, 1
    %v1956 = vperm.slane %v1834, 2
    %v1957 = vperm.slane %v1834, 3
    %v1958 = vperm.slane %v1834, 4
    %v1959 = vperm.slane %v1834, 5
    %v1960 = vperm.slane %v1834, 6
    %v1961 = vperm.slane %v1834, 7
    %v1962 = vperm.slane %v1835, 0
    %v1963 = vperm.slane %v1835, 1
    %v1964 = vperm.slane %v1835, 2
    %v1965 = vperm.slane %v1835, 3
    %v1966 = vperm.slane %v1835, 4
    %v1967 = vperm.slane %v1835, 5
    %v1968 = vperm.slane %v1835, 6
    %v1969 = vperm.slane %v1835, 7
    %v1970 = vperm.slane %v1836, 0
    %v1971 = vperm.slane %v1836, 1
    %v1972 = vperm.slane %v1836, 2
    %v1973 = vperm.slane %v1836, 3
    %v1974 = vperm.slane %v1836, 4
    %v1975 = vperm.slane %v1836, 5
    %v1976 = vperm.slane %v1836, 6
    %v1977 = vperm.slane %v1836, 7
    %v1978 = vperm.slane %v1837, 0
    %v1979 = vperm.slane %v1837, 1
    %v1980 = vperm.slane %v1837, 2
    %v1981 = vperm.slane %v1837, 3
    %v1982 = vperm.slane %v1837, 4
    %v1983 = vperm.slane %v1837, 5
    %v1984 = vperm.slane %v1837, 6
    %v1985 = vperm.slane %v1837, 7
    %v1986 = vperm.slane %v1838, 0
    %v1987 = vperm.slane %v1838, 1
    %v1988 = vperm.slane %v1838, 2
    %v1989 = vperm.slane %v1838, 3
    %v1990 = vperm.slane %v1838, 4
    %v1991 = vperm.slane %v1838, 5
    %v1992 = vperm.slane %v1838, 6
    %v1993 = vperm.slane %v1838, 7
    %v1994 = vperm.slane %v1839, 0
    %v1995 = vperm.slane %v1839, 1
    %v1996 = vperm.slane %v1839, 2
    %v1997 = vperm.slane %v1839, 3
    %v1998 = vperm.slane %v1839, 4
    %v1999 = vperm.slane %v1839, 5
    %v2000 = vperm.slane %v1839, 6
    %v2001 = vperm.slane %v1839, 7
    %v2002 = vperm.slane %v1840, 0
    %v2003 = vperm.slane %v1840, 1
    %v2004 = vperm.slane %v1840, 2
    %v2005 = vperm.slane %v1840, 3
    %v2006 = vperm.slane %v1840, 4
    %v2007 = vperm.slane %v1840, 5
    %v2008 = vperm.slane %v1840, 6
    %v2009 = vperm.slane %v1840, 7
    %v2010 = vperm.slane %v1841, 0
    %v2011 = vperm.slane %v1841, 1
    %v2012 = vperm.slane %v1841, 2
    %v2013 = vperm.slane %v1841, 3
    %v2014 = vperm.slane %v1841, 4
    %v2015 = vperm.slane %v1841, 5
    %v2016 = vperm.slane %v1841, 6
    %v2017 = vperm.slane %v1841, 7
    %v2018 = vperm.slane %v1842, 0
    %v2019 = vperm.slane %v1842, 1
    %v2020 = vperm.slane %v1842, 2
    %v2021 = vperm.slane %v1842, 3
    %v2022 = vperm.slane %v1842, 4
    %v2023 = vperm.slane %v1842, 5
    %v2024 = vperm.slane %v1842, 6
    %v2025 = vperm.slane %v1842, 7
    %v2026 = vperm.slane %v1843, 0
    %v2027 = vperm.slane %v1843, 1
    %v2028 = vperm.slane %v1843, 2
    %v2029 = vperm.slane %v1843, 3
    %v2030 = vperm.slane %v1843, 4
    %v2031 = vperm.slane %v1843, 5
    %v2032 = vperm.slane %v1843, 6
    %v2033 = vperm.slane %v1843, 7
    %v2034 = vperm.slane %v1844, 0
    %v2035 = vperm.slane %v1844, 1
    %v2036 = vperm.slane %v1844, 2
    %v2037 = vperm.slane %v1844, 3
    %v2038 = vperm.slane %v1844, 4
    %v2039 = vperm.slane %v1844, 5
    %v2040 = vperm.slane %v1844, 6
    %v2041 = vperm.slane %v1844, 7
    %v2042 = vperm.slane %v1845, 0
    %v2043 = vperm.slane %v1845, 1
    %v2044 = vperm.slane %v1845, 2
    %v2045 = vperm.slane %v1845, 3
    %v2046 = vperm.slane %v1845, 4
    %v2047 = vperm.slane %v1845, 5
    %v2048 = vperm.slane %v1845, 6
    %v2049 = vperm.slane %v1845, 7
    %v2050 = vperm.slane %v1846, 0
    %v2051 = vperm.slane %v1846, 1
    %v2052 = vperm.slane %v1846, 2
    %v2053 = vperm.slane %v1846, 3
    %v2054 = vperm.slane %v1846, 4
    %v2055 = vperm.slane %v1846, 5
    %v2056 = vperm.slane %v1846, 6
    %v2057 = vperm.slane %v1846, 7
    %v2058 = vperm.slane %v1847, 0
    %v2059 = vperm.slane %v1847, 1
    %v2060 = vperm.slane %v1847, 2
    %v2061 = vperm.slane %v1847, 3
    %v2062 = vperm.slane %v1847, 4
    %v2063 = vperm.slane %v1847, 5
    %v2064 = vperm.slane %v1847, 6
    %v2065 = vperm.slane %v1847, 7
    %v2066 = vperm.slane %v1848, 0
    %v2067 = vperm.slane %v1848, 1
    %v2068 = vperm.slane %v1848, 2
    %v2069 = vperm.slane %v1848, 3
    %v2070 = vperm.slane %v1848, 4
    %v2071 = vperm.slane %v1848, 5
    %v2072 = vperm.slane %v1848, 6
    %v2073 = vperm.slane %v1848, 7
    %v2074 = vperm.slane %v1849, 0
    %v2075 = vperm.slane %v1849, 1
    %v2076 = vperm.slane %v1849, 2
    %v2077 = vperm.slane %v1849, 3
    %v2078 = vperm.slane %v1849, 4
    %v2079 = vperm.slane %v1849, 5
    %v2080 = vperm.slane %v1849, 6
    %v2081 = vperm.slane %v1849, 7
    %v2082 = vperm.slane %v1850, 0
    %v2083 = vperm.slane %v1850, 1
    %v2084 = vperm.slane %v1850, 2
    %v2085 = vperm.slane %v1850, 3
    %v2086 = vperm.slane %v1850, 4
    %v2087 = vperm.slane %v1850, 5
    %v2088 = vperm.slane %v1850, 6
    %v2089 = vperm.slane %v1850, 7
    %v2090 = vperm.slane %v1851, 0
    %v2091 = vperm.slane %v1851, 1
    %v2092 = vperm.slane %v1851, 2
    %v2093 = vperm.slane %v1851, 3
    %v2094 = vperm.slane %v1851, 4
    %v2095 = vperm.slane %v1851, 5
    %v2096 = vperm.slane %v1851, 6
    %v2097 = vperm.slane %v1851, 7
    %v2098 = vperm.slane %v1852, 0
    %v2099 = vperm.slane %v1852, 1
    %v2100 = vperm.slane %v1852, 2
    %v2101 = vperm.slane %v1852, 3
    %v2102 = vperm.slane %v1852, 4
    %v2103 = vperm.slane %v1852, 5
    %v2104 = vperm.slane %v1852, 6
    %v2105 = vperm.slane %v1852, 7
    %v2106 = vperm.slane %v1853, 0
    %v2107 = vperm.slane %v1853, 1
    %v2108 = vperm.slane %v1853, 2
    %v2109 = vperm.slane %v1853, 3
    %v2110 = vperm.slane %v1853, 4
    %v2111 = vperm.slane %v1853, 5
    %v2112 = vperm.slane %v1853, 6
    %v2113 = vperm.slane %v1853, 7
    %v2114 = vperm.slane %v1854, 0
    %v2115 = vperm.slane %v1854, 1
    %v2116 = vperm.slane %v1854, 2
    %v2117 = vperm.slane %v1854, 3
    %v2118 = vperm.slane %v1854, 4
    %v2119 = vperm.slane %v1854, 5
    %v2120 = vperm.slane %v1854, 6
    %v2121 = vperm.slane %v1854, 7
    %v2122 = vperm.slane %v1855, 0
    %v2123 = vperm.slane %v1855, 1
    %v2124 = vperm.slane %v1855, 2
    %v2125 = vperm.slane %v1855, 3
    %v2126 = vperm.slane %v1855, 4
    %v2127 = vperm.slane %v1855, 5
    %v2128 = vperm.slane %v1855, 6
    %v2129 = vperm.slane %v1855, 7
    %v2130 = vperm.slane %v1856, 0
    %v2131 = vperm.slane %v1856, 1
    %v2132 = vperm.slane %v1856, 2
    %v2133 = vperm.slane %v1856, 3
    %v2134 = vperm.slane %v1856, 4
    %v2135 = vperm.slane %v1856, 5
    %v2136 = vperm.slane %v1856, 6
    %v2137 = vperm.slane %v1856, 7
    %v2138 = vperm.slane %v1857, 0
    %v2139 = vperm.slane %v1857, 1
    %v2140 = vperm.slane %v1857, 2
    %v2141 = vperm.slane %v1857, 3
    %v2142 = vperm.slane %v1857, 4
    %v2143 = vperm.slane %v1857, 5
    %v2144 = vperm.slane %v1857, 6
    %v2145 = vperm.slane %v1857, 7
    %2146 = vst [vmem:[#allocation1] ss:$9 sm:$0xff] %v1890
    %s2147 = scalar_lea.vmem [#allocation1], 1
    %2148 = vst [vmem:[%s2147] ss:$9 sm:$0xff] %v1891
    %s2149 = scalar_lea.vmem [#allocation1], 2
    %2150 = vst [vmem:[%s2149] ss:$9 sm:$0xff] %v1892
    %s2151 = scalar_lea.vmem [#allocation1], 3
    %2152 = vst [vmem:[%s2151] ss:$9 sm:$0xff] %v1893
    %s2153 = scalar_lea.vmem [#allocation1], 4
    %2154 = vst [vmem:[%s2153] ss:$9 sm:$0xff] %v1894
    %s2155 = scalar_lea.vmem [#allocation1], 5
    %2156 = vst [vmem:[%s2155] ss:$9 sm:$0xff] %v1895
    %s2157 = scalar_lea.vmem [#allocation1], 6
    %2158 = vst [vmem:[%s2157] ss:$9 sm:$0xff] %v1896
    %s2159 = scalar_lea.vmem [#allocation1], 7
    %2160 = vst [vmem:[%s2159] ss:$9 sm:$0xff] %v1897
    %v2161 = vld [vmem:[#allocation1] sm:$0xff]
    %2162 = vst [vmem:[#allocation1] ss:$9 sm:$0xff] %v1898
    %2163 = vst [vmem:[%s2147] ss:$9 sm:$0xff] %v1899
    %2164 = vst [vmem:[%s2149] ss:$9 sm:$0xff] %v1900
    %2165 = vst [vmem:[%s2151] ss:$9 sm:$0xff] %v1901
    %2166 = vst [vmem:[%s2153] ss:$9 sm:$0xff] %v1902
    %2167 = vst [vmem:[%s2155] ss:$9 sm:$0xff] %v1903
    %2168 = vst [vmem:[%s2157] ss:$9 sm:$0xff] %v1904
    %2169 = vst [vmem:[%s2159] ss:$9 sm:$0xff] %v1905
    %v2170 = vld [vmem:[#allocation1] sm:$0xff]
    %2171 = vst [vmem:[#allocation1] ss:$9 sm:$0xff] %v1906
    %2172 = vst [vmem:[%s2147] ss:$9 sm:$0xff] %v1907
    %2173 = vst [vmem:[%s2149] ss:$9 sm:$0xff] %v1908
    %2174 = vst [vmem:[%s2151] ss:$9 sm:$0xff] %v1909
    %2175 = vst [vmem:[%s2153] ss:$9 sm:$0xff] %v1910
    %2176 = vst [vmem:[%s2155] ss:$9 sm:$0xff] %v1911
    %2177 = vst [vmem:[%s2157] ss:$9 sm:$0xff] %v1912
    %2178 = vst [vmem:[%s2159] ss:$9 sm:$0xff] %v1913
    %v2179 = vld [vmem:[#allocation1] sm:$0xff]
    %2180 = vst [vmem:[#allocation1] ss:$9 sm:$0xff] %v1914
    %2181 = vst [vmem:[%s2147] ss:$9 sm:$0xff] %v1915
    %2182 = vst [vmem:[%s2149] ss:$9 sm:$0xff] %v1916
    %2183 = vst [vmem:[%s2151] ss:$9 sm:$0xff] %v1917
    %2184 = vst [vmem:[%s2153] ss:$9 sm:$0xff] %v1918
    %2185 = vst [vmem:[%s2155] ss:$9 sm:$0xff] %v1919
    %2186 = vst [vmem:[%s2157] ss:$9 sm:$0xff] %v1920
    %2187 = vst [vmem:[%s2159] ss:$9 sm:$0xff] %v1921
    %v2188 = vld [vmem:[#allocation1] sm:$0xff]
    %2189 = vst [vmem:[#allocation1] ss:$9 sm:$0xff] %v1922
    %2190 = vst [vmem:[%s2147] ss:$9 sm:$0xff] %v1923
    %2191 = vst [vmem:[%s2149] ss:$9 sm:$0xff] %v1924
    %2192 = vst [vmem:[%s2151] ss:$9 sm:$0xff] %v1925
    %2193 = vst [vmem:[%s2153] ss:$9 sm:$0xff] %v1926
    %2194 = vst [vmem:[%s2155] ss:$9 sm:$0xff] %v1927
    %2195 = vst [vmem:[%s2157] ss:$9 sm:$0xff] %v1928
    %2196 = vst [vmem:[%s2159] ss:$9 sm:$0xff] %v1929
    %v2197 = vld [vmem:[#allocation1] sm:$0xff]
    %2198 = vst [vmem:[#allocation1] ss:$9 sm:$0xff] %v1930
    %2199 = vst [vmem:[%s2147] ss:$9 sm:$0xff] %v1931
    %2200 = vst [vmem:[%s2149] ss:$9 sm:$0xff] %v1932
    %2201 = vst [vmem:[%s2151] ss:$9 sm:$0xff] %v1933
    %2202 = vst [vmem:[%s2153] ss:$9 sm:$0xff] %v1934
    %2203 = vst [vmem:[%s2155] ss:$9 sm:$0xff] %v1935
    %2204 = vst [vmem:[%s2157] ss:$9 sm:$0xff] %v1936
    %2205 = vst [vmem:[%s2159] ss:$9 sm:$0xff] %v1937
    %v2206 = vld [vmem:[#allocation1] sm:$0xff]
    %2207 = vst [vmem:[#allocation1] ss:$9 sm:$0xff] %v1938
    %2208 = vst [vmem:[%s2147] ss:$9 sm:$0xff] %v1939
    %2209 = vst [vmem:[%s2149] ss:$9 sm:$0xff] %v1940
    %2210 = vst [vmem:[%s2151] ss:$9 sm:$0xff] %v1941
    %2211 = vst [vmem:[%s2153] ss:$9 sm:$0xff] %v1942
    %2212 = vst [vmem:[%s2155] ss:$9 sm:$0xff] %v1943
    %2213 = vst [vmem:[%s2157] ss:$9 sm:$0xff] %v1944
    %2214 = vst [vmem:[%s2159] ss:$9 sm:$0xff] %v1945
    %v2215 = vld [vmem:[#allocation1] sm:$0xff]
    %2216 = vst [vmem:[#allocation1] ss:$9 sm:$0xff] %v1946
    %2217 = vst [vmem:[%s2147] ss:$9 sm:$0xff] %v1947
    %2218 = vst [vmem:[%s2149] ss:$9 sm:$0xff] %v1948
    %2219 = vst [vmem:[%s2151] ss:$9 sm:$0xff] %v1949
    %2220 = vst [vmem:[%s2153] ss:$9 sm:$0xff] %v1950
    %2221 = vst [vmem:[%s2155] ss:$9 sm:$0xff] %v1951
    %2222 = vst [vmem:[%s2157] ss:$9 sm:$0xff] %v1952
    %2223 = vst [vmem:[%s2159] ss:$9 sm:$0xff] %v1953
    %v2224 = vld [vmem:[#allocation1] sm:$0xff]
    %2225 = vst [vmem:[#allocation1] ss:$9 sm:$0xff] %v1954
    %2226 = vst [vmem:[%s2147] ss:$9 sm:$0xff] %v1955
    %2227 = vst [vmem:[%s2149] ss:$9 sm:$0xff] %v1956
    %2228 = vst [vmem:[%s2151] ss:$9 sm:$0xff] %v1957
    %2229 = vst [vmem:[%s2153] ss:$9 sm:$0xff] %v1958
    %2230 = vst [vmem:[%s2155] ss:$9 sm:$0xff] %v1959
    %2231 = vst [vmem:[%s2157] ss:$9 sm:$0xff] %v1960
    %2232 = vst [vmem:[%s2159] ss:$9 sm:$0xff] %v1961
    %v2233 = vld [vmem:[#allocation1] sm:$0xff]
    %2234 = vst [vmem:[#allocation1] ss:$9 sm:$0xff] %v1962
    %2235 = vst [vmem:[%s2147] ss:$9 sm:$0xff] %v1963
    %2236 = vst [vmem:[%s2149] ss:$9 sm:$0xff] %v1964
    %2237 = vst [vmem:[%s2151] ss:$9 sm:$0xff] %v1965
    %2238 = vst [vmem:[%s2153] ss:$9 sm:$0xff] %v1966
    %2239 = vst [vmem:[%s2155] ss:$9 sm:$0xff] %v1967
    %2240 = vst [vmem:[%s2157] ss:$9 sm:$0xff] %v1968
    %2241 = vst [vmem:[%s2159] ss:$9 sm:$0xff] %v1969
    %v2242 = vld [vmem:[#allocation1] sm:$0xff]
    %2243 = vst [vmem:[#allocation1] ss:$9 sm:$0xff] %v1970
    %2244 = vst [vmem:[%s2147] ss:$9 sm:$0xff] %v1971
    %2245 = vst [vmem:[%s2149] ss:$9 sm:$0xff] %v1972
    %2246 = vst [vmem:[%s2151] ss:$9 sm:$0xff] %v1973
    %2247 = vst [vmem:[%s2153] ss:$9 sm:$0xff] %v1974
    %2248 = vst [vmem:[%s2155] ss:$9 sm:$0xff] %v1975
    %2249 = vst [vmem:[%s2157] ss:$9 sm:$0xff] %v1976
    %2250 = vst [vmem:[%s2159] ss:$9 sm:$0xff] %v1977
    %v2251 = vld [vmem:[#allocation1] sm:$0xff]
    %2252 = vst [vmem:[#allocation1] ss:$9 sm:$0xff] %v1978
    %2253 = vst [vmem:[%s2147] ss:$9 sm:$0xff] %v1979
    %2254 = vst [vmem:[%s2149] ss:$9 sm:$0xff] %v1980
    %2255 = vst [vmem:[%s2151] ss:$9 sm:$0xff] %v1981
    %2256 = vst [vmem:[%s2153] ss:$9 sm:$0xff] %v1982
    %2257 = vst [vmem:[%s2155] ss:$9 sm:$0xff] %v1983
    %2258 = vst [vmem:[%s2157] ss:$9 sm:$0xff] %v1984
    %2259 = vst [vmem:[%s2159] ss:$9 sm:$0xff] %v1985
    %v2260 = vld [vmem:[#allocation1] sm:$0xff]
    %2261 = vst [vmem:[#allocation1] ss:$9 sm:$0xff] %v1986
    %2262 = vst [vmem:[%s2147] ss:$9 sm:$0xff] %v1987
    %2263 = vst [vmem:[%s2149] ss:$9 sm:$0xff] %v1988
    %2264 = vst [vmem:[%s2151] ss:$9 sm:$0xff] %v1989
    %2265 = vst [vmem:[%s2153] ss:$9 sm:$0xff] %v1990
    %2266 = vst [vmem:[%s2155] ss:$9 sm:$0xff] %v1991
    %2267 = vst [vmem:[%s2157] ss:$9 sm:$0xff] %v1992
    %2268 = vst [vmem:[%s2159] ss:$9 sm:$0xff] %v1993
    %v2269 = vld [vmem:[#allocation1] sm:$0xff]
    %2270 = vst [vmem:[#allocation1] ss:$9 sm:$0xff] %v1994
    %2271 = vst [vmem:[%s2147] ss:$9 sm:$0xff] %v1995
    %2272 = vst [vmem:[%s2149] ss:$9 sm:$0xff] %v1996
    %2273 = vst [vmem:[%s2151] ss:$9 sm:$0xff] %v1997
    %2274 = vst [vmem:[%s2153] ss:$9 sm:$0xff] %v1998
    %2275 = vst [vmem:[%s2155] ss:$9 sm:$0xff] %v1999
    %2276 = vst [vmem:[%s2157] ss:$9 sm:$0xff] %v2000
    %2277 = vst [vmem:[%s2159] ss:$9 sm:$0xff] %v2001
    %v2278 = vld [vmem:[#allocation1] sm:$0xff]
    %2279 = vst [vmem:[#allocation1] ss:$9 sm:$0xff] %v2002
    %2280 = vst [vmem:[%s2147] ss:$9 sm:$0xff] %v2003
    %2281 = vst [vmem:[%s2149] ss:$9 sm:$0xff] %v2004
    %2282 = vst [vmem:[%s2151] ss:$9 sm:$0xff] %v2005
    %2283 = vst [vmem:[%s2153] ss:$9 sm:$0xff] %v2006
    %2284 = vst [vmem:[%s2155] ss:$9 sm:$0xff] %v2007
    %2285 = vst [vmem:[%s2157] ss:$9 sm:$0xff] %v2008
    %2286 = vst [vmem:[%s2159] ss:$9 sm:$0xff] %v2009
    %v2287 = vld [vmem:[#allocation1] sm:$0xff]
    %2288 = vst [vmem:[#allocation1] ss:$9 sm:$0xff] %v2010
    %2289 = vst [vmem:[%s2147] ss:$9 sm:$0xff] %v2011
    %2290 = vst [vmem:[%s2149] ss:$9 sm:$0xff] %v2012
    %2291 = vst [vmem:[%s2151] ss:$9 sm:$0xff] %v2013
    %2292 = vst [vmem:[%s2153] ss:$9 sm:$0xff] %v2014
    %2293 = vst [vmem:[%s2155] ss:$9 sm:$0xff] %v2015
    %2294 = vst [vmem:[%s2157] ss:$9 sm:$0xff] %v2016
    %2295 = vst [vmem:[%s2159] ss:$9 sm:$0xff] %v2017
    %v2296 = vld [vmem:[#allocation1] sm:$0xff]
    %2297 = vst [vmem:[#allocation1] ss:$9 sm:$0xff] %v2018
    %2298 = vst [vmem:[%s2147] ss:$9 sm:$0xff] %v2019
    %2299 = vst [vmem:[%s2149] ss:$9 sm:$0xff] %v2020
    %2300 = vst [vmem:[%s2151] ss:$9 sm:$0xff] %v2021
    %2301 = vst [vmem:[%s2153] ss:$9 sm:$0xff] %v2022
    %2302 = vst [vmem:[%s2155] ss:$9 sm:$0xff] %v2023
    %2303 = vst [vmem:[%s2157] ss:$9 sm:$0xff] %v2024
    %2304 = vst [vmem:[%s2159] ss:$9 sm:$0xff] %v2025
    %v2305 = vld [vmem:[#allocation1] sm:$0xff]
    %2306 = vst [vmem:[#allocation1] ss:$9 sm:$0xff] %v2026
    %2307 = vst [vmem:[%s2147] ss:$9 sm:$0xff] %v2027
    %2308 = vst [vmem:[%s2149] ss:$9 sm:$0xff] %v2028
    %2309 = vst [vmem:[%s2151] ss:$9 sm:$0xff] %v2029
    %2310 = vst [vmem:[%s2153] ss:$9 sm:$0xff] %v2030
    %2311 = vst [vmem:[%s2155] ss:$9 sm:$0xff] %v2031
    %2312 = vst [vmem:[%s2157] ss:$9 sm:$0xff] %v2032
    %2313 = vst [vmem:[%s2159] ss:$9 sm:$0xff] %v2033
    %v2314 = vld [vmem:[#allocation1] sm:$0xff]
    %2315 = vst [vmem:[#allocation1] ss:$9 sm:$0xff] %v2034
    %2316 = vst [vmem:[%s2147] ss:$9 sm:$0xff] %v2035
    %2317 = vst [vmem:[%s2149] ss:$9 sm:$0xff] %v2036
    %2318 = vst [vmem:[%s2151] ss:$9 sm:$0xff] %v2037
    %2319 = vst [vmem:[%s2153] ss:$9 sm:$0xff] %v2038
    %2320 = vst [vmem:[%s2155] ss:$9 sm:$0xff] %v2039
    %2321 = vst [vmem:[%s2157] ss:$9 sm:$0xff] %v2040
    %2322 = vst [vmem:[%s2159] ss:$9 sm:$0xff] %v2041
    %v2323 = vld [vmem:[#allocation1] sm:$0xff]
    %2324 = vst [vmem:[#allocation1] ss:$9 sm:$0xff] %v2042
    %2325 = vst [vmem:[%s2147] ss:$9 sm:$0xff] %v2043
    %2326 = vst [vmem:[%s2149] ss:$9 sm:$0xff] %v2044
    %2327 = vst [vmem:[%s2151] ss:$9 sm:$0xff] %v2045
    %2328 = vst [vmem:[%s2153] ss:$9 sm:$0xff] %v2046
    %2329 = vst [vmem:[%s2155] ss:$9 sm:$0xff] %v2047
    %2330 = vst [vmem:[%s2157] ss:$9 sm:$0xff] %v2048
    %2331 = vst [vmem:[%s2159] ss:$9 sm:$0xff] %v2049
    %v2332 = vld [vmem:[#allocation1] sm:$0xff]
    %2333 = vst [vmem:[#allocation1] ss:$9 sm:$0xff] %v2050
    %2334 = vst [vmem:[%s2147] ss:$9 sm:$0xff] %v2051
    %2335 = vst [vmem:[%s2149] ss:$9 sm:$0xff] %v2052
    %2336 = vst [vmem:[%s2151] ss:$9 sm:$0xff] %v2053
    %2337 = vst [vmem:[%s2153] ss:$9 sm:$0xff] %v2054
    %2338 = vst [vmem:[%s2155] ss:$9 sm:$0xff] %v2055
    %2339 = vst [vmem:[%s2157] ss:$9 sm:$0xff] %v2056
    %2340 = vst [vmem:[%s2159] ss:$9 sm:$0xff] %v2057
    %v2341 = vld [vmem:[#allocation1] sm:$0xff]
    %2342 = vst [vmem:[#allocation1] ss:$9 sm:$0xff] %v2058
    %2343 = vst [vmem:[%s2147] ss:$9 sm:$0xff] %v2059
    %2344 = vst [vmem:[%s2149] ss:$9 sm:$0xff] %v2060
    %2345 = vst [vmem:[%s2151] ss:$9 sm:$0xff] %v2061
    %2346 = vst [vmem:[%s2153] ss:$9 sm:$0xff] %v2062
    %2347 = vst [vmem:[%s2155] ss:$9 sm:$0xff] %v2063
    %2348 = vst [vmem:[%s2157] ss:$9 sm:$0xff] %v2064
    %2349 = vst [vmem:[%s2159] ss:$9 sm:$0xff] %v2065
    %v2350 = vld [vmem:[#allocation1] sm:$0xff]
    %2351 = vst [vmem:[#allocation1] ss:$9 sm:$0xff] %v2066
    %2352 = vst [vmem:[%s2147] ss:$9 sm:$0xff] %v2067
    %2353 = vst [vmem:[%s2149] ss:$9 sm:$0xff] %v2068
    %2354 = vst [vmem:[%s2151] ss:$9 sm:$0xff] %v2069
    %2355 = vst [vmem:[%s2153] ss:$9 sm:$0xff] %v2070
    %2356 = vst [vmem:[%s2155] ss:$9 sm:$0xff] %v2071
    %2357 = vst [vmem:[%s2157] ss:$9 sm:$0xff] %v2072
    %2358 = vst [vmem:[%s2159] ss:$9 sm:$0xff] %v2073
    %v2359 = vld [vmem:[#allocation1] sm:$0xff]
    %2360 = vst [vmem:[#allocation1] ss:$9 sm:$0xff] %v2074
    %2361 = vst [vmem:[%s2147] ss:$9 sm:$0xff] %v2075
    %2362 = vst [vmem:[%s2149] ss:$9 sm:$0xff] %v2076
    %2363 = vst [vmem:[%s2151] ss:$9 sm:$0xff] %v2077
    %2364 = vst [vmem:[%s2153] ss:$9 sm:$0xff] %v2078
    %2365 = vst [vmem:[%s2155] ss:$9 sm:$0xff] %v2079
    %2366 = vst [vmem:[%s2157] ss:$9 sm:$0xff] %v2080
    %2367 = vst [vmem:[%s2159] ss:$9 sm:$0xff] %v2081
    %v2368 = vld [vmem:[#allocation1] sm:$0xff]
    %2369 = vst [vmem:[#allocation1] ss:$9 sm:$0xff] %v2082
    %2370 = vst [vmem:[%s2147] ss:$9 sm:$0xff] %v2083
    %2371 = vst [vmem:[%s2149] ss:$9 sm:$0xff] %v2084
    %2372 = vst [vmem:[%s2151] ss:$9 sm:$0xff] %v2085
    %2373 = vst [vmem:[%s2153] ss:$9 sm:$0xff] %v2086
    %2374 = vst [vmem:[%s2155] ss:$9 sm:$0xff] %v2087
    %2375 = vst [vmem:[%s2157] ss:$9 sm:$0xff] %v2088
    %2376 = vst [vmem:[%s2159] ss:$9 sm:$0xff] %v2089
    %v2377 = vld [vmem:[#allocation1] sm:$0xff]
    %2378 = vst [vmem:[#allocation1] ss:$9 sm:$0xff] %v2090
    %2379 = vst [vmem:[%s2147] ss:$9 sm:$0xff] %v2091
    %2380 = vst [vmem:[%s2149] ss:$9 sm:$0xff] %v2092
    %2381 = vst [vmem:[%s2151] ss:$9 sm:$0xff] %v2093
    %2382 = vst [vmem:[%s2153] ss:$9 sm:$0xff] %v2094
    %2383 = vst [vmem:[%s2155] ss:$9 sm:$0xff] %v2095
    %2384 = vst [vmem:[%s2157] ss:$9 sm:$0xff] %v2096
    %2385 = vst [vmem:[%s2159] ss:$9 sm:$0xff] %v2097
    %v2386 = vld [vmem:[#allocation1] sm:$0xff]
    %2387 = vst [vmem:[#allocation1] ss:$9 sm:$0xff] %v2098
    %2388 = vst [vmem:[%s2147] ss:$9 sm:$0xff] %v2099
    %2389 = vst [vmem:[%s2149] ss:$9 sm:$0xff] %v2100
    %2390 = vst [vmem:[%s2151] ss:$9 sm:$0xff] %v2101
    %2391 = vst [vmem:[%s2153] ss:$9 sm:$0xff] %v2102
    %2392 = vst [vmem:[%s2155] ss:$9 sm:$0xff] %v2103
    %2393 = vst [vmem:[%s2157] ss:$9 sm:$0xff] %v2104
    %2394 = vst [vmem:[%s2159] ss:$9 sm:$0xff] %v2105
    %v2395 = vld [vmem:[#allocation1] sm:$0xff]
    %2396 = vst [vmem:[#allocation1] ss:$9 sm:$0xff] %v2106
    %2397 = vst [vmem:[%s2147] ss:$9 sm:$0xff] %v2107
    %2398 = vst [vmem:[%s2149] ss:$9 sm:$0xff] %v2108
    %2399 = vst [vmem:[%s2151] ss:$9 sm:$0xff] %v2109
    %2400 = vst [vmem:[%s2153] ss:$9 sm:$0xff] %v2110
    %2401 = vst [vmem:[%s2155] ss:$9 sm:$0xff] %v2111
    %2402 = vst [vmem:[%s2157] ss:$9 sm:$0xff] %v2112
    %2403 = vst [vmem:[%s2159] ss:$9 sm:$0xff] %v2113
    %v2404 = vld [vmem:[#allocation1] sm:$0xff]
    %2405 = vst [vmem:[#allocation1] ss:$9 sm:$0xff] %v2114
    %2406 = vst [vmem:[%s2147] ss:$9 sm:$0xff] %v2115
    %2407 = vst [vmem:[%s2149] ss:$9 sm:$0xff] %v2116
    %2408 = vst [vmem:[%s2151] ss:$9 sm:$0xff] %v2117
    %2409 = vst [vmem:[%s2153] ss:$9 sm:$0xff] %v2118
    %2410 = vst [vmem:[%s2155] ss:$9 sm:$0xff] %v2119
    %2411 = vst [vmem:[%s2157] ss:$9 sm:$0xff] %v2120
    %2412 = vst [vmem:[%s2159] ss:$9 sm:$0xff] %v2121
    %v2413 = vld [vmem:[#allocation1] sm:$0xff]
    %2414 = vst [vmem:[#allocation1] ss:$9 sm:$0xff] %v2122
    %2415 = vst [vmem:[%s2147] ss:$9 sm:$0xff] %v2123
    %2416 = vst [vmem:[%s2149] ss:$9 sm:$0xff] %v2124
    %2417 = vst [vmem:[%s2151] ss:$9 sm:$0xff] %v2125
    %2418 = vst [vmem:[%s2153] ss:$9 sm:$0xff] %v2126
    %2419 = vst [vmem:[%s2155] ss:$9 sm:$0xff] %v2127
    %2420 = vst [vmem:[%s2157] ss:$9 sm:$0xff] %v2128
    %2421 = vst [vmem:[%s2159] ss:$9 sm:$0xff] %v2129
    %v2422 = vld [vmem:[#allocation1] sm:$0xff]
    %2423 = vst [vmem:[#allocation1] ss:$9 sm:$0xff] %v2130
    %2424 = vst [vmem:[%s2147] ss:$9 sm:$0xff] %v2131
    %2425 = vst [vmem:[%s2149] ss:$9 sm:$0xff] %v2132
    %2426 = vst [vmem:[%s2151] ss:$9 sm:$0xff] %v2133
    %2427 = vst [vmem:[%s2153] ss:$9 sm:$0xff] %v2134
    %2428 = vst [vmem:[%s2155] ss:$9 sm:$0xff] %v2135
    %2429 = vst [vmem:[%s2157] ss:$9 sm:$0xff] %v2136
    %2430 = vst [vmem:[%s2159] ss:$9 sm:$0xff] %v2137
    %v2431 = vld [vmem:[#allocation1] sm:$0xff]
    %2432 = vst [vmem:[#allocation1] ss:$9 sm:$0xff] %v2138
    %2433 = vst [vmem:[%s2147] ss:$9 sm:$0xff] %v2139
    %2434 = vst [vmem:[%s2149] ss:$9 sm:$0xff] %v2140
    %2435 = vst [vmem:[%s2151] ss:$9 sm:$0xff] %v2141
    %2436 = vst [vmem:[%s2153] ss:$9 sm:$0xff] %v2142
    %2437 = vst [vmem:[%s2155] ss:$9 sm:$0xff] %v2143
    %2438 = vst [vmem:[%s2157] ss:$9 sm:$0xff] %v2144
    %2439 = vst [vmem:[%s2159] ss:$9 sm:$0xff] %v2145
    %v2440 = vld [vmem:[#allocation1] sm:$0xff]
    %2441 = vset.pattern.permute.xlu0 0
    %2442 = vperm.xlu0 %2441, %v2161
    %v2443 = vpop.permute.xlu0 %2442
    %2444 = vset.pattern.permute.xlu0 0
    %2445 = vperm.xlu0 %2444, %v2170
    %v2446 = vpop.permute.xlu0 %2445
    %2447 = vset.pattern.permute.xlu0 0
    %2448 = vperm.xlu0 %2447, %v2179
    %v2449 = vpop.permute.xlu0 %2448
    %2450 = vset.pattern.permute.xlu0 0
    %2451 = vperm.xlu0 %2450, %v2188
    %v2452 = vpop.permute.xlu0 %2451
    %2453 = vset.pattern.permute.xlu0 0
    %2454 = vperm.xlu0 %2453, %v2197
    %v2455 = vpop.permute.xlu0 %2454
    %2456 = vset.pattern.permute.xlu0 0
    %2457 = vperm.xlu0 %2456, %v2206
    %v2458 = vpop.permute.xlu0 %2457
    %2459 = vset.pattern.permute.xlu0 0
    %2460 = vperm.xlu0 %2459, %v2215
    %v2461 = vpop.permute.xlu0 %2460
    %2462 = vset.pattern.permute.xlu0 0
    %2463 = vperm.xlu0 %2462, %v2224
    %v2464 = vpop.permute.xlu0 %2463
    %2465 = vset.pattern.permute.xlu0 0
    %2466 = vperm.xlu0 %2465, %v2233
    %v2467 = vpop.permute.xlu0 %2466
    %2468 = vset.pattern.permute.xlu0 0
    %2469 = vperm.xlu0 %2468, %v2242
    %v2470 = vpop.permute.xlu0 %2469
    %2471 = vset.pattern.permute.xlu0 0
    %2472 = vperm.xlu0 %2471, %v2251
    %v2473 = vpop.permute.xlu0 %2472
    %2474 = vset.pattern.permute.xlu0 0
    %2475 = vperm.xlu0 %2474, %v2260
    %v2476 = vpop.permute.xlu0 %2475
    %2477 = vset.pattern.permute.xlu0 0
    %2478 = vperm.xlu0 %2477, %v2269
    %v2479 = vpop.permute.xlu0 %2478
    %2480 = vset.pattern.permute.xlu0 0
    %2481 = vperm.xlu0 %2480, %v2278
    %v2482 = vpop.permute.xlu0 %2481
    %2483 = vset.pattern.permute.xlu0 0
    %2484 = vperm.xlu0 %2483, %v2287
    %v2485 = vpop.permute.xlu0 %2484
    %2486 = vset.pattern.permute.xlu0 0
    %2487 = vperm.xlu0 %2486, %v2296
    %v2488 = vpop.permute.xlu0 %2487
    %2489 = vset.pattern.permute.xlu0 0
    %2490 = vperm.xlu0 %2489, %v2305
    %v2491 = vpop.permute.xlu0 %2490
    %2492 = vset.pattern.permute.xlu0 0
    %2493 = vperm.xlu0 %2492, %v2314
    %v2494 = vpop.permute.xlu0 %2493
    %2495 = vset.pattern.permute.xlu0 0
    %2496 = vperm.xlu0 %2495, %v2323
    %v2497 = vpop.permute.xlu0 %2496
    %2498 = vset.pattern.permute.xlu0 0
    %2499 = vperm.xlu0 %2498, %v2332
    %v2500 = vpop.permute.xlu0 %2499
    %2501 = vset.pattern.permute.xlu0 0
    %2502 = vperm.xlu0 %2501, %v2341
    %v2503 = vpop.permute.xlu0 %2502
    %2504 = vset.pattern.permute.xlu0 0
    %2505 = vperm.xlu0 %2504, %v2350
    %v2506 = vpop.permute.xlu0 %2505
    %2507 = vset.pattern.permute.xlu0 0
    %2508 = vperm.xlu0 %2507, %v2359
    %v2509 = vpop.permute.xlu0 %2508
    %2510 = vset.pattern.permute.xlu0 0
    %2511 = vperm.xlu0 %2510, %v2368
    %v2512 = vpop.permute.xlu0 %2511
    %2513 = vset.pattern.permute.xlu0 0
    %2514 = vperm.xlu0 %2513, %v2377
    %v2515 = vpop.permute.xlu0 %2514
    %2516 = vset.pattern.permute.xlu0 0
    %2517 = vperm.xlu0 %2516, %v2386
    %v2518 = vpop.permute.xlu0 %2517
    %2519 = vset.pattern.permute.xlu0 0
    %2520 = vperm.xlu0 %2519, %v2395
    %v2521 = vpop.permute.xlu0 %2520
    %2522 = vset.pattern.permute.xlu0 0
    %2523 = vperm.xlu0 %2522, %v2404
    %v2524 = vpop.permute.xlu0 %2523
    %2525 = vset.pattern.permute.xlu0 0
    %2526 = vperm.xlu0 %2525, %v2413
    %v2527 = vpop.permute.xlu0 %2526
    %2528 = vset.pattern.permute.xlu0 0
    %2529 = vperm.xlu0 %2528, %v2422
    %v2530 = vpop.permute.xlu0 %2529
    %2531 = vset.pattern.permute.xlu0 0
    %2532 = vperm.xlu0 %2531, %v2431
    %v2533 = vpop.permute.xlu0 %2532
    %2534 = vset.pattern.permute.xlu0 0
    %2535 = vperm.xlu0 %2534, %v2440
    %v2536 = vpop.permute.xlu0 %2535
    %v2537 = vperm.slane %v2443, %v69
    %v2538 = vadd.s32 %v69, 4294967288
    %v2539 = vperm.slane %v2446, %v2538
    %vm2540 = vcmask 130112
    %v2541 = vsel %vm2540, %v2539, %v2537
    %v2542 = vadd.s32 %v69, 4294967280
    %v2543 = vperm.slane %v2449, %v2542
    %vm2544 = vcmask 195712
    %v2545 = vsel %vm2544, %v2543, %v2541
    %v2546 = vadd.s32 %v69, 4294967272
    %v2547 = vperm.slane %v2452, %v2546
    %vm2548 = vcmask 261312
    %v2549 = vsel %vm2548, %v2547, %v2545
    %v2550 = vadd.s32 %v69, 4294967264
    %v2551 = vperm.slane %v2455, %v2550
    %vm2552 = vcmask 326912
    %v2553 = vsel %vm2552, %v2551, %v2549
    %v2554 = vadd.s32 %v69, 4294967256
    %v2555 = vperm.slane %v2458, %v2554
    %vm2556 = vcmask 392512
    %v2557 = vsel %vm2556, %v2555, %v2553
    %v2558 = vadd.s32 %v69, 4294967248
    %v2559 = vperm.slane %v2461, %v2558
    %vm2560 = vcmask 458112
    %v2561 = vsel %vm2560, %v2559, %v2557
    %v2562 = vadd.s32 %v69, 4294967240
    %v2563 = vperm.slane %v2464, %v2562
    %vm2564 = vcmask 523712
    %v2565 = vsel %vm2564, %v2563, %v2561
    %v2566 = vadd.s32 %v69, 4294967232
    %v2567 = vperm.slane %v2467, %v2566
    %vm2568 = vcmask 589312
    %v2569 = vsel %vm2568, %v2567, %v2565
    %v2570 = vadd.s32 %v69, 4294967224
    %v2571 = vperm.slane %v2470, %v2570
    %vm2572 = vcmask 654912
    %v2573 = vsel %vm2572, %v2571, %v2569
    %v2574 = vadd.s32 %v69, 4294967216
    %v2575 = vperm.slane %v2473, %v2574
    %vm2576 = vcmask 720512
    %v2577 = vsel %vm2576, %v2575, %v2573
    %v2578 = vadd.s32 %v69, 4294967208
    %v2579 = vperm.slane %v2476, %v2578
    %vm2580 = vcmask 786112
    %v2581 = vsel %vm2580, %v2579, %v2577
    %v2582 = vadd.s32 %v69, 4294967200
    %v2583 = vperm.slane %v2479, %v2582
    %vm2584 = vcmask 851712
    %v2585 = vsel %vm2584, %v2583, %v2581
    %v2586 = vadd.s32 %v69, 4294967192
    %v2587 = vperm.slane %v2482, %v2586
    %vm2588 = vcmask 917312
    %v2589 = vsel %vm2588, %v2587, %v2585
    %v2590 = vadd.s32 %v69, 4294967184
    %v2591 = vperm.slane %v2485, %v2590
    %vm2592 = vcmask 982912
    %v2593 = vsel %vm2592, %v2591, %v2589
    %v2594 = vadd.s32 %v69, 4294967176
    %v2595 = vperm.slane %v2488, %v2594
    %vm2596 = vcmask 1048512
    %v2597 = vsel %vm2596, %v2595, %v2593
    %v2598 = vperm.slane %v2491, %v69
    %v2599 = vperm.slane %v2494, %v2538
    %v2600 = vsel %vm2540, %v2599, %v2598
    %v2601 = vperm.slane %v2497, %v2542
    %v2602 = vsel %vm2544, %v2601, %v2600
    %v2603 = vperm.slane %v2500, %v2546
    %v2604 = vsel %vm2548, %v2603, %v2602
    %v2605 = vperm.slane %v2503, %v2550
    %v2606 = vsel %vm2552, %v2605, %v2604
    %v2607 = vperm.slane %v2506, %v2554
    %v2608 = vsel %vm2556, %v2607, %v2606
    %v2609 = vperm.slane %v2509, %v2558
    %v2610 = vsel %vm2560, %v2609, %v2608
    %v2611 = vperm.slane %v2512, %v2562
    %v2612 = vsel %vm2564, %v2611, %v2610
    %v2613 = vperm.slane %v2515, %v2566
    %v2614 = vsel %vm2568, %v2613, %v2612
    %v2615 = vperm.slane %v2518, %v2570
    %v2616 = vsel %vm2572, %v2615, %v2614
    %v2617 = vperm.slane %v2521, %v2574
    %v2618 = vsel %vm2576, %v2617, %v2616
    %v2619 = vperm.slane %v2524, %v2578
    %v2620 = vsel %vm2580, %v2619, %v2618
    %v2621 = vperm.slane %v2527, %v2582
    %v2622 = vsel %vm2584, %v2621, %v2620
    %v2623 = vperm.slane %v2530, %v2586
    %v2624 = vsel %vm2588, %v2623, %v2622
    %v2625 = vperm.slane %v2533, %v2590
    %v2626 = vsel %vm2592, %v2625, %v2624
    %v2627 = vperm.slane %v2536, %v2594
    %v2628 = vsel %vm2596, %v2627, %v2626
    %v2629 = vrot.slane %v2628, 7
    %vm2630 = vcmask 1040384
    %v2631 = vsel %vm2630, %v2597, %v2629
    %v2633 = vlaneseq
    %vm2634 = vcmp.ge.s32.totalorder %v2633, 0
    %vm2635 = vcmp.lt.s32.totalorder %v2633, 256
    %vm2636 = vmand %vm2634, %vm2635
    %2637 = vst.msk [vmem:[#allocation3] sm:$0x3] %vm2636, %v2631
    // Predicated region
    $region38: #{tpu_custom_call.1} parent=1 // pred_check
      _
    $region39: #{tpu_custom_call.1} parent=1 // pred_check_branch
      %2639 = sbr.rel (0) target = $region41
    $region40: #{tpu_custom_call.1} parent=1 // pred_region
      %2641 = vsyncadd [#allocation4], 0
      %s2643 = sshll.u32 [#allocation3], 4
      %s2644 = int_to_ptr.vmem [resolvable:$true] %s2643
      %s2645 = sshll.u32 %s9, 4
      %s2646 = int_to_ptr.hbm [resolvable:$true] %s2645
      %2648 = dma.vmem_to_hbm [thread:$0]  %s2644, 32, %s2646, [#allocation4]
    $region41: #{tpu_custom_call.1} parent=1 // pred_fallthru
      _
    // Predicated region
    $region42: #{tpu_custom_call.1} parent=1 // pred_check
      _
    $region43: #{tpu_custom_call.1} parent=1 // pred_check_branch
      %2650 = sbr.rel (0) target = $region45
    $region44: #{tpu_custom_call.1} parent=1 // pred_region
      %2652 = dma.done [#allocation4], 32
    $region45: #{tpu_custom_call.1} parent=1 // pred_fallthru
      _
    %2653 = vsyncpa [#allocation4], 1

</llo_original>
